<compile_context>
chip_gen: v5e
topology: v5e:2x2
jax: 0.10.0
libtpu: 0.0.40
codegen_flags: <defaults>
</compile_context>

<pallas_src>
import functools

import jax
import jax.numpy as jnp
from jax.experimental import pallas as pl
from jax.experimental.pallas import tpu as pltpu


_BT = 8       # batch-tile rows (sublane multiple)
_HALO = 128   # lane-aligned halo carrying the ktaps-1 spill elements
_NEG = float(jnp.finfo(jnp.float32).min)


# ----------------------------- Pallas kernel ------------------------------ #
def mtcnn_kernel(x_ref, w_ref, bconv_ref, lim_ref, fw_ref, o_ref, m_ref,
                 *, chunk, ktaps, mask_from):
    t = pl.program_id(2)

    xe = x_ref[...]                                     # (Bt, chunk + HALO)
    w = w_ref[...]                                      # (Fg, ktaps)
    bt = xe.shape[0]
    fg = w.shape[0]

    # im2col-style tap stack (tiny) + MXU contraction over the taps:
    #   acc[b, f, c] = sum_j x[b, c + j] * w[f, j]
    xw = jnp.stack([xe[:, j:j + chunk] for j in range(ktaps)], axis=1)  # (Bt,ktaps,chunk)
    wb = jnp.broadcast_to(w[None], (bt, fg, ktaps))
    acc = jnp.einsum("bfk,bkc->bfc", wb, xw,
                     preferred_element_type=jnp.float32)                # (Bt,Fg,chunk)

    @pl.when(t == 0)
    def _init():
        m_ref[...] = jnp.full(m_ref.shape, _NEG, jnp.float32)

    # Interior chunks contain only valid window positions -> plain max.
    @pl.when(t < mask_from)
    def _interior():
        m_ref[...] = jnp.maximum(m_ref[...], jnp.max(acc, axis=-1))

    # Tail chunk(s): mask branch-dependent invalid tails + the zero padding.
    # This per-position masking is what keeps the bias+ReLU hoist below exact:
    # the running max only ever sees valid window positions.
    @pl.when(t >= mask_from)
    def _tail():
        pos = t * chunk + jax.lax.broadcasted_iota(jnp.int32, (1, 1, chunk), 2)
        valid = pos <= lim_ref[...][None]               # (1, Fg, chunk)
        cmax = jnp.max(jnp.where(valid, acc, _NEG), axis=-1)
        m_ref[...] = jnp.maximum(m_ref[...], cmax)

    @pl.when(t == pl.num_programs(2) - 1)
    def _finalize():
        # Bias + ReLU after the pool (exact, see above), then this filter
        # group's contribution to all four FC heads as one fused MXU matmul.
        feat = jnp.maximum(m_ref[...] + bconv_ref[0], 0.0)      # (Bt, Fg)
        o_ref[...] = jnp.dot(feat, fw_ref[...],
                             preferred_element_type=jnp.float32)[None]


# ------------------------------- wrapper ----------------------------------- #
def _round_up(a, m):
    return (a + m - 1) // m * m


def mtcnn_forward(tokens, params, cfg, *, chunk_target=1024, n_filter_groups=2):
    """Runs the MTCNN forward; returns (subsite, laterality, behavior, grade)."""
    B = tokens.shape[0]
    L, D = cfg["max_sent_len"], cfg["word_dim"]
    lseq = L * D
    k1, k2, k3 = cfg["kernel1"], cfg["kernel2"], cfg["kernel3"]
    kmax = max(k1, k2, k3)
    ktaps = _round_up(kmax, 8)            # sublane-aligned tap count (zero-padded)
    f1, f2, f3 = cfg["num_filters1"], cfg["num_filters2"], cfg["num_filters3"]
    fsum = f1 + f2 + f3
    head_sizes = (cfg["subsite_size"], cfg["laterality_size"],
                  cfg["behavior_size"], cfg["grade_size"])
    n_total = sum(head_sizes)
    assert ktaps - 1 <= _HALO and lseq >= kmax

    # Embedding lookup (gather) as plain-JAX glue; flatten exactly like
    # `embedding(x).view(-1, 1, word_dim*max_sent_len)` with channel squeezed.
    emb = jnp.take(params["wv"], tokens, axis=0)                     # (B, L, D)
    x_seq = emb.reshape(B, lseq).astype(jnp.float32)

    # Chunk / tile geometry.
    chunk = min(_round_up(chunk_target, 128), _round_up(lseq, 128))
    n_chunks = -(-lseq // chunk)
    b_pad = _round_up(B, _BT)

    # Lay each chunk out contiguously with its HALO-wide spill region so the
    # kernel never concatenates x with its halo (one lane-dense slab per step).
    x_big = jnp.zeros((b_pad, (n_chunks + 1) * chunk), jnp.float32)
    x_big = x_big.at[:B, :lseq].set(x_seq)
    x_main = x_big[:, :n_chunks * chunk].reshape(b_pad, n_chunks, chunk)
    x_halo = (x_big[:, chunk:(n_chunks + 1) * chunk]
              .reshape(b_pad, n_chunks, chunk)[:, :, :_HALO])
    x_ext = jnp.concatenate([x_main, x_halo], axis=-1).reshape(
        b_pad, n_chunks * (chunk + _HALO))

    # First chunk that can contain an invalid window start (per-filter limits
    # lseq-k and the zero-padded tail).  Chunks < mask_from are fully valid,
    # which is what keeps the in-kernel bias+ReLU hoist exact.
    mask_from = max(0, min(n_chunks - 1, (lseq - kmax + 1) // chunk))

    # Fused conv filter bank, zero-padded to ktaps taps and to a filter count
    # divisible into n_filter_groups sublane-aligned groups (padded filters
    # have zero conv weights and zero FC rows -> contribute exactly nothing).
    n_groups = max(1, n_filter_groups)
    fsum_pad = _round_up(fsum, 8 * n_groups)
    fg = fsum_pad // n_groups

    def pad_k(w, k):
        return jnp.pad(w.astype(jnp.float32), ((0, 0), (0, ktaps - k)))

    w_fused = jnp.concatenate([pad_k(params["conv1_w"], k1),
                               pad_k(params["conv2_w"], k2),
                               pad_k(params["conv3_w"], k3)], axis=0)
    w_fused = jnp.pad(w_fused, ((0, fsum_pad - fsum), (0, 0)))       # (Fsum_pad, ktaps)
    b_fused = jnp.concatenate([params["conv1_b"], params["conv2_b"],
                               params["conv3_b"]]).astype(jnp.float32)
    b_fused = jnp.pad(b_fused, (0, fsum_pad - fsum)).reshape(n_groups, 1, fg)
    lim = jnp.concatenate([jnp.full((f1,), lseq - k1, jnp.int32),
                           jnp.full((f2,), lseq - k2, jnp.int32),
                           jnp.full((f3,), lseq - k3, jnp.int32)])
    lim = jnp.pad(lim, (0, fsum_pad - fsum), constant_values=-1)[:, None]

    # Fused FC heads: (Fsum_pad, n_total) weight; final bias added in wrapper.
    fw_all = jnp.concatenate([params["fc1_w"].T, params["fc2_w"].T,
                              params["fc3_w"].T, params["fc4_w"].T],
                             axis=1).astype(jnp.float32)
    fw_all = jnp.pad(fw_all, ((0, fsum_pad - fsum), (0, 0)))
    fb_all = jnp.concatenate([params["fc1_b"], params["fc2_b"],
                              params["fc3_b"], params["fc4_b"]]).astype(jnp.float32)

    grid = (b_pad // _BT, n_groups, n_chunks)
    kernel = functools.partial(mtcnn_kernel, chunk=chunk, ktaps=ktaps,
                               mask_from=mask_from)
    partials = pl.pallas_call(
        kernel,
        out_shape=jax.ShapeDtypeStruct((n_groups, b_pad, n_total), jnp.float32),
        grid_spec=pltpu.PrefetchScalarGridSpec(
            num_scalar_prefetch=0,
            grid=grid,
            in_specs=[
                pl.BlockSpec((_BT, chunk + _HALO), lambda b, g, t: (b, t)),  # x (+halo)
                pl.BlockSpec((fg, ktaps), lambda b, g, t: (g, 0)),           # conv W
                pl.BlockSpec((1, 1, fg), lambda b, g, t: (g, 0, 0)),         # conv bias
                pl.BlockSpec((fg, 1), lambda b, g, t: (g, 0)),               # valid limits
                pl.BlockSpec((fg, n_total), lambda b, g, t: (g, 0)),         # fused FC W
            ],
            out_specs=pl.BlockSpec((1, _BT, n_total), lambda b, g, t: (g, b, 0)),
            scratch_shapes=[pltpu.VMEM((_BT, fg), jnp.float32)],             # running max
        ),
        compiler_params=pltpu.CompilerParams(
            dimension_semantics=("parallel", "parallel", "arbitrary"),
            vmem_limit_bytes=64 * 1024 * 1024),
    )(x_ext, w_fused, b_fused, lim, fw_all)

    # Combine the per-group partial logits (tiny) and add the FC bias.
    logits = jnp.sum(partials, axis=0)[:B] + fb_all[None, :]
    n1, n2, n3, n4 = head_sizes
    return (logits[:, :n1],
            logits[:, n1:n1 + n2],
            logits[:, n1 + n2:n1 + n2 + n3],
            logits[:, n1 + n2 + n3:n1 + n2 + n3 + n4])


# ------------------------------ reference ---------------------------------- #
def ref_forward(tokens, params, cfg):
    B = tokens.shape[0]
    lseq = cfg["max_sent_len"] * cfg["word_dim"]
    x = jnp.take(params["wv"], tokens, axis=0).reshape(B, lseq).astype(jnp.float32)

    def conv_pool(w, b, k):
        lout = lseq - k + 1
        acc = jnp.zeros((B, w.shape[0], lout), jnp.float32)
        for j in range(k):
            acc = acc + x[:, None, j:j + lout] * w[:, j][None, :, None]
        acc = acc + b[None, :, None]
        return jnp.max(jax.nn.relu(acc), axis=-1)

    p1 = conv_pool(params["conv1_w"], params["conv1_b"], cfg["kernel1"])
    p2 = conv_pool(params["conv2_w"], params["conv2_b"], cfg["kernel2"])
    p3 = conv_pool(params["conv3_w"], params["conv3_b"], cfg["kernel3"])
    feat = jnp.concatenate([p1, p2, p3], axis=1)

    def fc(w, b):
        return jnp.dot(feat, w.T, precision=jax.lax.Precision.HIGHEST) + b

    return (fc(params["fc1_w"], params["fc1_b"]),
            fc(params["fc2_w"], params["fc2_b"]),
            fc(params["fc3_w"], params["fc3_b"]),
            fc(params["fc4_w"], params["fc4_b"]))


# --------------------------------- main ------------------------------------ #
if __name__ == "__main__":
    cfg = dict(
        kernel1=3, kernel2=4, kernel3=5,
        num_filters1=16, num_filters2=16, num_filters3=16,
        max_sent_len=8, word_dim=32, vocab_size=50,
        subsite_size=8, laterality_size=2, behavior_size=2, grade_size=4,
    )
    B = 2
    fsum = cfg["num_filters1"] + cfg["num_filters2"] + cfg["num_filters3"]

    key = jax.random.PRNGKey(0)
    ks = jax.random.split(key, 16)

    def u(k, shape, scale=0.2):
        return (jax.random.uniform(k, shape, jnp.float32) - 0.5) * 2.0 * scale

    params = {
        "wv": u(ks[0], (cfg["vocab_size"] + 2, cfg["word_dim"]), 1.0),
        # Conv1d(1, F, k): weight (F, 1, k) squeezed to (F, k), bias (F,).
        "conv1_w": u(ks[1], (cfg["num_filters1"], cfg["kernel1"])),
        "conv1_b": u(ks[2], (cfg["num_filters1"],)),
        "conv2_w": u(ks[3], (cfg["num_filters2"], cfg["kernel2"])),
        "conv2_b": u(ks[4], (cfg["num_filters2"],)),
        "conv3_w": u(ks[5], (cfg["num_filters3"], cfg["kernel3"])),
        "conv3_b": u(ks[6], (cfg["num_filters3"],)),
        # Linear(fsum, n): PyTorch weight (n, fsum), bias (n,).
        "fc1_w": u(ks[7], (cfg["subsite_size"], fsum)),
        "fc1_b": u(ks[8], (cfg["subsite_size"],)),
        "fc2_w": u(ks[9], (cfg["laterality_size"], fsum)),
        "fc2_b": u(ks[10], (cfg["laterality_size"],)),
        "fc3_w": u(ks[11], (cfg["behavior_size"], fsum)),
        "fc3_b": u(ks[12], (cfg["behavior_size"],)),
        "fc4_w": u(ks[13], (cfg["grade_size"], fsum)),
        "fc4_b": u(ks[14], (cfg["grade_size"],)),
    }

    tokens = jax.random.randint(
        ks[15], (B, cfg["max_sent_len"]), 0, cfg["vocab_size"] + 2, dtype=jnp.int32
    )

    refs = ref_forward(tokens, params, cfg)
    names = ("subsite", "laterality", "behavior", "grade")

    # Run once with the default (single-chunk here) geometry and once with a
    # small chunk so the multi-chunk streaming / running-max path is exercised.
    for ct in (1024, 128):
        outs = mtcnn_forward(tokens, params, cfg, chunk_target=ct)
        outs = jax.block_until_ready(outs)
        for name, o, r in zip(names, outs, refs):
            assert o.shape == r.shape and o.dtype == jnp.float32
            if not jnp.allclose(o, r, atol=1e-4, rtol=1e-4):
                raise AssertionError(
                    f"Pallas kernel output mismatch vs reference ({name}, chunk_target={ct})")

    print("KERNEL_OK")
</pallas_src>

<mosaic_0001>
module attributes {stable_mosaic.version = 11 : i64} {
  func.func @mtcnn_kernel(%arg0: i32, %arg1: i32, %arg2: i32, %arg3: memref<8x384xf32, #tpu.memory_space<vmem>>, %arg4: memref<24x8xf32, #tpu.memory_space<vmem>>, %arg5: memref<1x1x24xf32, #tpu.memory_space<vmem>>, %arg6: memref<24x1xi32, #tpu.memory_space<vmem>>, %arg7: memref<24x16xf32, #tpu.memory_space<vmem>>, %arg8: memref<1x8x16xf32, #tpu.memory_space<vmem>>, %arg9: memref<8x24xf32, #tpu.memory_space<vmem>>) attributes {dimension_semantics = [#tpu.dimension_semantics<parallel>, #tpu.dimension_semantics<parallel>, #tpu.dimension_semantics<arbitrary>], iteration_bounds = array<i64: 1, 2, 1>, scalar_prefetch = 0 : i64, scratch_operands = 1 : i64, tpu.core_type = #tpu.core_type<tc>, window_params = [{transform_indices = @transform_0, window_bounds = array<i64: 8, 384>}, {transform_indices = @transform_1, window_bounds = array<i64: 24, 8>}, {transform_indices = @transform_2, window_bounds = array<i64: 1, 1, 24>}, {transform_indices = @transform_3, window_bounds = array<i64: 24, 1>}, {transform_indices = @transform_4, window_bounds = array<i64: 24, 16>}, {transform_indices = @transform_5, window_bounds = array<i64: 1, 8, 16>}]} {
    %c0 = arith.constant 0 : index
    %c0_0 = arith.constant 0 : index
    %0 = vector.load %arg3[%c0, %c0_0] : memref<8x384xf32, #tpu.memory_space<vmem>>, vector<8x384xf32>
    %c0_1 = arith.constant 0 : index
    %c0_2 = arith.constant 0 : index
    %1 = vector.load %arg4[%c0_1, %c0_2] : memref<24x8xf32, #tpu.memory_space<vmem>>, vector<24x8xf32>
    %2 = vector.extract_strided_slice %0 {offsets = [0, 0], sizes = [8, 256], strides = [1, 1]} : vector<8x384xf32> to vector<8x256xf32>
    %3 = vector.extract_strided_slice %0 {offsets = [0, 1], sizes = [8, 256], strides = [1, 1]} : vector<8x384xf32> to vector<8x256xf32>
    %4 = vector.extract_strided_slice %0 {offsets = [0, 2], sizes = [8, 256], strides = [1, 1]} : vector<8x384xf32> to vector<8x256xf32>
    %5 = vector.extract_strided_slice %0 {offsets = [0, 3], sizes = [8, 256], strides = [1, 1]} : vector<8x384xf32> to vector<8x256xf32>
    %6 = vector.extract_strided_slice %0 {offsets = [0, 4], sizes = [8, 256], strides = [1, 1]} : vector<8x384xf32> to vector<8x256xf32>
    %7 = vector.extract_strided_slice %0 {offsets = [0, 5], sizes = [8, 256], strides = [1, 1]} : vector<8x384xf32> to vector<8x256xf32>
    %8 = vector.extract_strided_slice %0 {offsets = [0, 6], sizes = [8, 256], strides = [1, 1]} : vector<8x384xf32> to vector<8x256xf32>
    %9 = vector.extract_strided_slice %0 {offsets = [0, 7], sizes = [8, 256], strides = [1, 1]} : vector<8x384xf32> to vector<8x256xf32>
    %10 = vector.shape_cast %2 : vector<8x256xf32> to vector<8x1x256xf32>
    %11 = vector.shape_cast %3 : vector<8x256xf32> to vector<8x1x256xf32>
    %12 = vector.shape_cast %4 : vector<8x256xf32> to vector<8x1x256xf32>
    %13 = vector.shape_cast %5 : vector<8x256xf32> to vector<8x1x256xf32>
    %14 = vector.shape_cast %6 : vector<8x256xf32> to vector<8x1x256xf32>
    %15 = vector.shape_cast %7 : vector<8x256xf32> to vector<8x1x256xf32>
    %16 = vector.shape_cast %8 : vector<8x256xf32> to vector<8x1x256xf32>
    %17 = vector.shape_cast %9 : vector<8x256xf32> to vector<8x1x256xf32>
    %18 = tpu.concatenate %10, %11, %12, %13, %14, %15, %16, %17 in 1 : vector<8x1x256xf32>, vector<8x1x256xf32>, vector<8x1x256xf32>, vector<8x1x256xf32>, vector<8x1x256xf32>, vector<8x1x256xf32>, vector<8x1x256xf32>, vector<8x1x256xf32> -> vector<8x8x256xf32>
    %19 = vector.shape_cast %1 : vector<24x8xf32> to vector<1x24x8xf32>
    %20 = vector.shape_cast %19 : vector<1x24x8xf32> to vector<1x24x8xf32>
    %21 = vector.broadcast %20 : vector<1x24x8xf32> to vector<8x24x8xf32>
    "tpu.trace_start"() <{level = 10 : i32, message = "bfk,bkc->bfc"}> : () -> ()
    %cst = arith.constant dense<0.000000e+00> : vector<8x24x256xf32>
    %22 = tpu.matmul %21, %18, %cst {dimension_numbers = #tpu.dot_dimension_numbers<[2], [1], [1], [2], [0, 0, 0, 1, 1, 2], [0], [0]>} : vector<8x24x8xf32>, vector<8x8x256xf32>, vector<8x24x256xf32> -> vector<8x24x256xf32>
    %c0_i32 = arith.constant 0 : i32
    "tpu.trace_stop"() : () -> ()
    %23 = arith.cmpi eq, %arg2, %c0_i32 : i32
    %24 = arith.extui %23 : i1 to i32
    %c0_i32_3 = arith.constant 0 : i32
    %25 = arith.cmpi ne, %24, %c0_i32_3 : i32
    scf.if %25 {
      %cst_10 = arith.constant -3.40282347E+38 : f32
      %35 = vector.broadcast %cst_10 : f32 to vector<8x24xf32>
      %c0_11 = arith.constant 0 : index
      %c0_12 = arith.constant 0 : index
      %36 = vector.load %arg9[%c0_11, %c0_12] : memref<8x24xf32, #tpu.memory_space<vmem>>, vector<8x24xf32>
      tpu.vector_store %arg9[%c0_11, %c0_12], %35 {strides = array<i32>} : memref<8x24xf32, #tpu.memory_space<vmem>>, vector<8x24xf32>,
    } else {
    }
    %c0_i32_4 = arith.constant 0 : i32
    %26 = arith.cmpi slt, %arg2, %c0_i32_4 : i32
    %27 = arith.extui %26 : i1 to i32
    %c0_i32_5 = arith.constant 0 : i32
    %28 = arith.cmpi ne, %27, %c0_i32_5 : i32
    scf.if %28 {
      %c0_10 = arith.constant 0 : index
      %c0_11 = arith.constant 0 : index
      %35 = vector.load %arg9[%c0_10, %c0_11] : memref<8x24xf32, #tpu.memory_space<vmem>>, vector<8x24xf32>
      %cst_12 = arith.constant dense<0xFF800000> : vector<8x24xf32>
      %36 = vector.multi_reduction <maximumf>, %22, %cst_12 [2] : vector<8x24x256xf32> to vector<8x24xf32>
      %37 = arith.maximumf %35, %36 : vector<8x24xf32>
      %c0_13 = arith.constant 0 : index
      %c0_14 = arith.constant 0 : index
      %38 = vector.load %arg9[%c0_13, %c0_14] : memref<8x24xf32, #tpu.memory_space<vmem>>, vector<8x24xf32>
      tpu.vector_store %arg9[%c0_13, %c0_14], %37 {strides = array<i32>} : memref<8x24xf32, #tpu.memory_space<vmem>>, vector<8x24xf32>,
    } else {
    }
    %c0_i32_6 = arith.constant 0 : i32
    %29 = arith.cmpi sge, %arg2, %c0_i32_6 : i32
    %30 = arith.extui %29 : i1 to i32
    %c0_i32_7 = arith.constant 0 : i32
    %31 = arith.cmpi ne, %30, %c0_i32_7 : i32
    scf.if %31 {
      %c256_i32 = arith.constant 256 : i32
      %35 = arith.muli %arg2, %c256_i32 : i32
      %36 = tpu.iota {dimensions = array<i32: 2>} : vector<1x1x256xi32>
      %37 = vector.broadcast %35 : i32 to vector<1x1x256xi32>
      %38 = arith.addi %37, %36 : vector<1x1x256xi32>
      %c0_10 = arith.constant 0 : index
      %c0_11 = arith.constant 0 : index
      %39 = vector.load %arg6[%c0_10, %c0_11] : memref<24x1xi32, #tpu.memory_space<vmem>>, vector<24x1xi32>
      %40 = vector.shape_cast %39 : vector<24x1xi32> to vector<1x24x1xi32>
      %41 = vector.broadcast %38 : vector<1x1x256xi32> to vector<1x24x256xi32>
      %42 = vector.broadcast %40 : vector<1x24x1xi32> to vector<1x24x256xi32>
      %43 = arith.cmpi sle, %41, %42 : vector<1x24x256xi32>
      %cst_12 = arith.constant -3.40282347E+38 : f32
      %44 = vector.shape_cast %43 : vector<1x24x256xi1> to vector<1x24x256xi1>
      %45 = vector.broadcast %44 : vector<1x24x256xi1> to vector<8x24x256xi1>
      %46 = vector.broadcast %cst_12 : f32 to vector<8x24x256xf32>
      %47 = arith.select %45, %22, %46 : vector<8x24x256xi1>, vector<8x24x256xf32>
      %cst_13 = arith.constant dense<0xFF800000> : vector<8x24xf32>
      %48 = vector.multi_reduction <maximumf>, %47, %cst_13 [2] : vector<8x24x256xf32> to vector<8x24xf32>
      %c0_14 = arith.constant 0 : index
      %c0_15 = arith.constant 0 : index
      %49 = vector.load %arg9[%c0_14, %c0_15] : memref<8x24xf32, #tpu.memory_space<vmem>>, vector<8x24xf32>
      %50 = arith.maximumf %49, %48 : vector<8x24xf32>
      %c0_16 = arith.constant 0 : index
      %c0_17 = arith.constant 0 : index
      %51 = vector.load %arg9[%c0_16, %c0_17] : memref<8x24xf32, #tpu.memory_space<vmem>>, vector<8x24xf32>
      tpu.vector_store %arg9[%c0_16, %c0_17], %50 {strides = array<i32>} : memref<8x24xf32, #tpu.memory_space<vmem>>, vector<8x24xf32>,
    } else {
    }
    %c0_i32_8 = arith.constant 0 : i32
    %32 = arith.cmpi eq, %arg2, %c0_i32_8 : i32
    %33 = arith.extui %32 : i1 to i32
    %c0_i32_9 = arith.constant 0 : i32
    %34 = arith.cmpi ne, %33, %c0_i32_9 : i32
    scf.if %34 {
      %c0_10 = arith.constant 0 : index
      %c0_11 = arith.constant 0 : index
      %35 = vector.load %arg9[%c0_10, %c0_11] : memref<8x24xf32, #tpu.memory_space<vmem>>, vector<8x24xf32>
      %c0_12 = arith.constant 0 : index
      %c0_13 = arith.constant 0 : index
      %c0_14 = arith.constant 0 : index
      %36 = vector.load %arg5[%c0_12, %c0_13, %c0_14] : memref<1x1x24xf32, #tpu.memory_space<vmem>>, vector<1x1x24xf32>
      %37 = vector.shape_cast %36 : vector<1x1x24xf32> to vector<1x24xf32>
      %38 = vector.broadcast %37 : vector<1x24xf32> to vector<8x24xf32>
      %39 = arith.addf %35, %38 : vector<8x24xf32>
      %cst_15 = arith.constant 0.000000e+00 : f32
      %40 = vector.broadcast %cst_15 : f32 to vector<8x24xf32>
      %41 = arith.maximumf %39, %40 : vector<8x24xf32>
      %c0_16 = arith.constant 0 : index
      %c0_17 = arith.constant 0 : index
      %42 = vector.load %arg7[%c0_16, %c0_17] : memref<24x16xf32, #tpu.memory_space<vmem>>, vector<24x16xf32>
      %cst_18 = arith.constant dense<0.000000e+00> : vector<8x16xf32>
      %43 = tpu.matmul %41, %42, %cst_18 {dimension_numbers = #tpu.dot_dimension_numbers<[1], [0], [0], [1], [0, 0, 1, 1], [], []>} : vector<8x24xf32>, vector<24x16xf32>, vector<8x16xf32> -> vector<8x16xf32>
      %44 = vector.shape_cast %43 : vector<8x16xf32> to vector<1x8x16xf32>
      %c0_19 = arith.constant 0 : index
      %c0_20 = arith.constant 0 : index
      %c0_21 = arith.constant 0 : index
      %45 = vector.load %arg8[%c0_19, %c0_20, %c0_21] : memref<1x8x16xf32, #tpu.memory_space<vmem>>, vector<1x8x16xf32>
      tpu.vector_store %arg8[%c0_19, %c0_20, %c0_21], %44 {strides = array<i32>} : memref<1x8x16xf32, #tpu.memory_space<vmem>>, vector<1x8x16xf32>,
    } else {
    }
    return
  }
  func.func @transform_0(%arg0: i32, %arg1: i32, %arg2: i32) -> (i32, i32) {
    %c0_i32 = arith.constant 0 : i32
    return %arg0, %arg2 : i32, i32
  }
  func.func @transform_1(%arg0: i32, %arg1: i32, %arg2: i32) -> (i32, i32) {
    %c0_i32 = arith.constant 0 : i32
    %c0_i32_0 = arith.constant 0 : i32
    return %arg1, %c0_i32 : i32, i32
  }
  func.func @transform_2(%arg0: i32, %arg1: i32, %arg2: i32) -> (i32, i32, i32) {
    %c0_i32 = arith.constant 0 : i32
    %c0_i32_0 = arith.constant 0 : i32
    %c0_i32_1 = arith.constant 0 : i32
    return %arg1, %c0_i32, %c0_i32_0 : i32, i32, i32
  }
  func.func @transform_3(%arg0: i32, %arg1: i32, %arg2: i32) -> (i32, i32) {
    %c0_i32 = arith.constant 0 : i32
    %c0_i32_0 = arith.constant 0 : i32
    return %arg1, %c0_i32 : i32, i32
  }
  func.func @transform_4(%arg0: i32, %arg1: i32, %arg2: i32) -> (i32, i32) {
    %c0_i32 = arith.constant 0 : i32
    %c0_i32_0 = arith.constant 0 : i32
    return %arg1, %c0_i32 : i32, i32
  }
  func.func @transform_5(%arg0: i32, %arg1: i32, %arg2: i32) -> (i32, i32, i32) {
    %c0_i32 = arith.constant 0 : i32
    %c0_i32_0 = arith.constant 0 : i32
    return %arg1, %arg0, %c0_i32 : i32, i32, i32
  }
}

</mosaic_0001>

<llo_original>
// kernel: tpu_custom_call.1
$region0: #{tpu_custom_call.1}
  #allocation0 [shape = 'u32[]', space=smem, size = 0x4, offset = 0x4, fixed_abs, tag = 'smem constant byte address 0x4 - core index']
  #allocation1 [shape = 'u32[72,128]{1,0:T(1,128)}', space=vmem, size = 0x9000, scoped, tag = 'internal scratch']
  #allocation2 [shape = 'f32[8,24]{1,0:T(8,128)}', space=vmem, size = 0x1000, scoped, tag = 'scratch operand']
  %s0 = inlined_call_operand.vmem [shape: f32[8,384], index: 0, kind: input, shape index: {}]
  %s1 = inlined_call_operand.vmem [shape: f32[48,8], index: 1, kind: input, shape index: {}]
  %s2 = inlined_call_operand.vmem [shape: f32[2,1,24], index: 2, kind: input, shape index: {}]
  %s3 = inlined_call_operand.vmem [shape: s32[48,1], index: 3, kind: input, shape index: {}]
  %s4 = inlined_call_operand.vmem [shape: f32[48,16], index: 4, kind: input, shape index: {}]
  %s5 = inlined_call_operand.hbm [shape: f32[2,8,16], index: 5, kind: output, shape index: {}]
  %s6 = sld [smem:[#allocation0]]
  $region69: #{tpu_custom_call.1} parent=0
    _
  %s8 = ssub.s32 1, %s6
  %s9 = scalar_select 0, %s8, %s6
  $region1: #{tpu_custom_call.1} parent=0
    #allocation3 [shape = 'u8[8192]{0}', space=vmem, size = 0x2000, scoped, tag = 'output window, operand 0']
    #allocation4 [shape = 's32[2]{0}', space=sflag, size = 0x8, scoped, tag = 'scoped memory for tpu_custom_call.1']
    %10 = vsyncpa [#allocation4], 0
    %s11 = scalar_lea.sflag [#allocation4], 1
    %12 = vsyncpa %s11, 0
    loop: start=0, step=1, limit=4
    $region2: #{tpu_custom_call.1} parent=1 // loop_pre_header
      _
    $region3: #{tpu_custom_call.1} parent=1 // loop_header
      %s14 = sphi 0, %s18
      %p15 = scmp.ge.s32.totalorder %s14, 4
      %s21 = sphi 0, %s40
      %s22 = sphi 0, %s36
      %s23 = sphi 0, %s32
      %s24 = sphi 0, %s21
      %s25 = sphi 0, %s22
      %s26 = sphi 0, %s23
      %s27 = sphi 0, %s24
      %s28 = sphi 0, %s25
      %s29 = sphi 0, %s26
      %s45 = sphi 0, %s47
      %s48 = sphi 0, %s45
      %s49 = sphi 0, %s48
      %s65 = sphi 0, %s49
      %s71 = sphi 0, %s73
      %s74 = sphi 0, %s71
      %s75 = sphi 0, %s74
      %s91 = sphi 0, %s75
      %s97 = sphi 0, %s99
      %s100 = sphi 0, %s97
      %s101 = sphi 0, %s100
      %s117 = sphi 0, %s101
      %s123 = sphi 0, %s125
      %s126 = sphi 0, %s123
      %s127 = sphi 0, %s126
      %s143 = sphi 0, %s127
      %s149 = sphi 0, %s151
      %s152 = sphi 0, %s149
      %s153 = sphi 0, %s152
      %s169 = sphi 0, %s153
      %s177 = sphi 0, %s179
      %s180 = sphi 0, %s177
      %s181 = sphi 0, %s180
      %s197 = sphi 0, %s181
    $region4: #{tpu_custom_call.1} parent=1 // loop_header_branch
      %17 = sbr.rel (%p15) target = $region8
    $region5: #{tpu_custom_call.1} parent=1 // loop_body
      %s19 = ssub.s32 %s14, 1
      %s20 = ssub.s32 %s14, 2
      %s30 = sadd.s32 1, %s23
      %p31 = scmp.ge.s32.totalorder %s30, 1
      %s32 = scalar_select %p31, 0, %s30
      %s33 = sadd.s32 1, %s22
      %s34 = scalar_select %p31, %s33, %s22
      %p35 = scmp.ge.s32.totalorder %s34, 2
      %s36 = scalar_select %p35, 0, %s34
      %s37 = sadd.s32 1, %s21
      %s38 = scalar_select %p35, %s37, %s21
      %p39 = scmp.ge.s32.totalorder %s38, 1
      %s40 = scalar_select %p39, 0, %s38
      %s41 = ssub.s32 %s21, %s40
      %s42 = ssub.s32 %s23, %s32
      %s43 = sor.u32 %s41, %s42
      %p44 = scmp.eq.s32.totalorder %s43, 0
      %s46 = sadd.s32 %s45, 1
      %s47 = scalar_select %p44, %s45, %s46
      %p50 = pneg %p44
      %p51 = scmp.eq.s32.totalorder %s14, 1
      %p52 = por %p50, %p51
      %p53 = scmp.ne.s32.totalorder %s45, %s48
      %p54 = scmp.eq.s32.totalorder %s14, 0
      %p55 = por %p53, %p54
      %p56 = scmp.ne.s32.totalorder %s45, %s48
      %p57 = scmp.eq.s32.totalorder %s19, 1
      %p58 = por %p56, %p57
      %p59 = scmp.ne.s32.totalorder %s48, %s49
      %p60 = scmp.eq.s32.totalorder %s19, 0
      %p61 = por %p59, %p60
      %p62 = scmp.ne.s32.totalorder %s48, %s49
      %p63 = scmp.eq.s32.totalorder %s20, 1
      %p64 = por %p62, %p63
      %p66 = scmp.ne.s32.totalorder %s49, %s65
      %p67 = scmp.eq.s32.totalorder %s20, 0
      %p68 = por %p66, %p67
      %s69 = ssub.s32 %s22, %s36
      %p70 = scmp.eq.s32.totalorder %s69, 0
      %s72 = sadd.s32 %s71, 1
      %s73 = scalar_select %p70, %s71, %s72
      %p76 = pneg %p70
      %p77 = scmp.eq.s32.totalorder %s14, 1
      %p78 = por %p76, %p77
      %p79 = scmp.ne.s32.totalorder %s71, %s74
      %p80 = scmp.eq.s32.totalorder %s14, 0
      %p81 = por %p79, %p80
      %p82 = scmp.ne.s32.totalorder %s71, %s74
      %p83 = scmp.eq.s32.totalorder %s19, 1
      %p84 = por %p82, %p83
      %p85 = scmp.ne.s32.totalorder %s74, %s75
      %p86 = scmp.eq.s32.totalorder %s19, 0
      %p87 = por %p85, %p86
      %p88 = scmp.ne.s32.totalorder %s74, %s75
      %p89 = scmp.eq.s32.totalorder %s20, 1
      %p90 = por %p88, %p89
      %p92 = scmp.ne.s32.totalorder %s75, %s91
      %p93 = scmp.eq.s32.totalorder %s20, 0
      %p94 = por %p92, %p93
      %s95 = ssub.s32 %s22, %s36
      %p96 = scmp.eq.s32.totalorder %s95, 0
      %s98 = sadd.s32 %s97, 1
      %s99 = scalar_select %p96, %s97, %s98
      %p102 = pneg %p96
      %p103 = scmp.eq.s32.totalorder %s14, 1
      %p104 = por %p102, %p103
      %p105 = scmp.ne.s32.totalorder %s97, %s100
      %p106 = scmp.eq.s32.totalorder %s14, 0
      %p107 = por %p105, %p106
      %p108 = scmp.ne.s32.totalorder %s97, %s100
      %p109 = scmp.eq.s32.totalorder %s19, 1
      %p110 = por %p108, %p109
      %p111 = scmp.ne.s32.totalorder %s100, %s101
      %p112 = scmp.eq.s32.totalorder %s19, 0
      %p113 = por %p111, %p112
      %p114 = scmp.ne.s32.totalorder %s100, %s101
      %p115 = scmp.eq.s32.totalorder %s20, 1
      %p116 = por %p114, %p115
      %p118 = scmp.ne.s32.totalorder %s101, %s117
      %p119 = scmp.eq.s32.totalorder %s20, 0
      %p120 = por %p118, %p119
      %s121 = ssub.s32 %s22, %s36
      %p122 = scmp.eq.s32.totalorder %s121, 0
      %s124 = sadd.s32 %s123, 1
      %s125 = scalar_select %p122, %s123, %s124
      %p128 = pneg %p122
      %p129 = scmp.eq.s32.totalorder %s14, 1
      %p130 = por %p128, %p129
      %p131 = scmp.ne.s32.totalorder %s123, %s126
      %p132 = scmp.eq.s32.totalorder %s14, 0
      %p133 = por %p131, %p132
      %p134 = scmp.ne.s32.totalorder %s123, %s126
      %p135 = scmp.eq.s32.totalorder %s19, 1
      %p136 = por %p134, %p135
      %p137 = scmp.ne.s32.totalorder %s126, %s127
      %p138 = scmp.eq.s32.totalorder %s19, 0
      %p139 = por %p137, %p138
      %p140 = scmp.ne.s32.totalorder %s126, %s127
      %p141 = scmp.eq.s32.totalorder %s20, 1
      %p142 = por %p140, %p141
      %p144 = scmp.ne.s32.totalorder %s127, %s143
      %p145 = scmp.eq.s32.totalorder %s20, 0
      %p146 = por %p144, %p145
      %s147 = ssub.s32 %s22, %s36
      %p148 = scmp.eq.s32.totalorder %s147, 0
      %s150 = sadd.s32 %s149, 1
      %s151 = scalar_select %p148, %s149, %s150
      %p154 = pneg %p148
      %p155 = scmp.eq.s32.totalorder %s14, 1
      %p156 = por %p154, %p155
      %p157 = scmp.ne.s32.totalorder %s149, %s152
      %p158 = scmp.eq.s32.totalorder %s14, 0
      %p159 = por %p157, %p158
      %p160 = scmp.ne.s32.totalorder %s149, %s152
      %p161 = scmp.eq.s32.totalorder %s19, 1
      %p162 = por %p160, %p161
      %p163 = scmp.ne.s32.totalorder %s152, %s153
      %p164 = scmp.eq.s32.totalorder %s19, 0
      %p165 = por %p163, %p164
      %p166 = scmp.ne.s32.totalorder %s152, %s153
      %p167 = scmp.eq.s32.totalorder %s20, 1
      %p168 = por %p166, %p167
      %p170 = scmp.ne.s32.totalorder %s153, %s169
      %p171 = scmp.eq.s32.totalorder %s20, 0
      %p172 = por %p170, %p171
      %s173 = ssub.s32 %s22, %s36
      %s174 = ssub.s32 %s21, %s40
      %s175 = sor.u32 %s173, %s174
      %p176 = scmp.eq.s32.totalorder %s175, 0
      %s178 = sadd.s32 %s177, 1
      %s179 = scalar_select %p176, %s177, %s178
      %p182 = pneg %p176
      %p183 = scmp.eq.s32.totalorder %s14, 1
      %p184 = por %p182, %p183
      %p185 = scmp.ne.s32.totalorder %s177, %s180
      %p186 = scmp.eq.s32.totalorder %s14, 0
      %p187 = por %p185, %p186
      %p188 = scmp.ne.s32.totalorder %s177, %s180
      %p189 = scmp.eq.s32.totalorder %s19, 1
      %p190 = por %p188, %p189
      %p191 = scmp.ne.s32.totalorder %s180, %s181
      %p192 = scmp.eq.s32.totalorder %s19, 0
      %p193 = por %p191, %p192
      %p194 = scmp.ne.s32.totalorder %s180, %s181
      %p195 = scmp.eq.s32.totalorder %s20, 1
      %p196 = por %p194, %p195
      %p198 = scmp.ne.s32.totalorder %s181, %s197
      %p199 = scmp.eq.s32.totalorder %s20, 0
      %p200 = por %p198, %p199
      %p201 = scmp.le.s32.totalorder 1, %s14
      %p202 = scmp.lt.s32.totalorder %s14, 3
      %p203 = pnand %p201, %p202
      %p204 = pneg %p203
      // Predicated region
      $region9: #{tpu_custom_call.1} parent=5 // pred_check
        _
      $region10: #{tpu_custom_call.1} parent=5 // pred_check_branch
        %206 = sbr.rel (%p203) target = $region12
      $region11: #{tpu_custom_call.1} parent=5 // pred_region
        %s207 = ssub.s32 %s14, 1
        // Predicated region
        $region13: #{tpu_custom_call.1} parent=11 // pred_check
          %p208 = pneg %p61
        $region14: #{tpu_custom_call.1} parent=11 // pred_check_branch
          %210 = sbr.rel (%p208) target = $region16
        $region15: #{tpu_custom_call.1} parent=11 // pred_region
          %s211 = smul.u32 3, %s26
          %p212 = scmp.lt.s32.totalorder %s24, 0
          %s213 = scalar_select %p212, %s24, 0
          %p214 = scmp.lt.s32.totalorder %s211, 2
          %s215 = scalar_select %p214, %s211, 2
          %s216 = smul.addr %s213, 3
          %s217 = sadd.s32 %s215, %s216
          %s218 = smul.addr %s217, 8
          %s219 = scalar_lea.vmem %s0, %s218
          %s220 = smul.u32 3, %s26
        $region16: #{tpu_custom_call.1} parent=11 // pred_fallthru
          _
      $region12: #{tpu_custom_call.1} parent=5 // pred_fallthru
        _
      %p221 = scmp.lt.s32.totalorder %s14, 2
      // Predicated region
      $region17: #{tpu_custom_call.1} parent=5 // pred_check
        %p222 = pneg %p221
      $region18: #{tpu_custom_call.1} parent=5 // pred_check_branch
        %224 = sbr.rel (%p222) target = $region20
      $region19: #{tpu_custom_call.1} parent=5 // pred_region
        // Predicated region
        $region21: #{tpu_custom_call.1} parent=19 // pred_check
          %p225 = pneg %p81
        $region22: #{tpu_custom_call.1} parent=19 // pred_check_branch
          %227 = sbr.rel (%p225) target = $region24
        $region23: #{tpu_custom_call.1} parent=19 // pred_region
          %s228 = smul.u32 3, %s22
          %p229 = scmp.lt.s32.totalorder %s228, 5
          %s230 = scalar_select %p229, %s228, 5
          %s231 = smul.addr %s230, 8
          %s232 = scalar_lea.vmem %s1, %s231
          %s233 = smul.u32 3, %s22
        $region24: #{tpu_custom_call.1} parent=19 // pred_fallthru
          _
        // Predicated region
        $region25: #{tpu_custom_call.1} parent=19 // pred_check
          %p234 = pneg %p107
        $region26: #{tpu_custom_call.1} parent=19 // pred_check_branch
          %236 = sbr.rel (%p234) target = $region28
        $region27: #{tpu_custom_call.1} parent=19 // pred_region
          %p237 = scmp.lt.s32.totalorder %s22, 1
          %s238 = scalar_select %p237, %s22, 1
          %s239 = scalar_lea.vmem %s2, %s238
        $region28: #{tpu_custom_call.1} parent=19 // pred_fallthru
          _
        // Predicated region
        $region29: #{tpu_custom_call.1} parent=19 // pred_check
          %p240 = pneg %p133
        $region30: #{tpu_custom_call.1} parent=19 // pred_check_branch
          %242 = sbr.rel (%p240) target = $region32
        $region31: #{tpu_custom_call.1} parent=19 // pred_region
          %s243 = smul.u32 3, %s22
          %p244 = scmp.lt.s32.totalorder %s243, 5
          %s245 = scalar_select %p244, %s243, 5
          %s246 = smul.addr %s245, 8
          %s247 = scalar_lea.vmem %s3, %s246
          %s248 = smul.u32 3, %s22
        $region32: #{tpu_custom_call.1} parent=19 // pred_fallthru
          _
        // Predicated region
        $region33: #{tpu_custom_call.1} parent=19 // pred_check
          %p249 = pneg %p159
        $region34: #{tpu_custom_call.1} parent=19 // pred_check_branch
          %251 = sbr.rel (%p249) target = $region36
        $region35: #{tpu_custom_call.1} parent=19 // pred_region
          %s252 = smul.u32 3, %s22
          %p253 = scmp.lt.s32.totalorder %s252, 5
          %s254 = scalar_select %p253, %s252, 5
          %s255 = smul.addr %s254, 8
          %s256 = scalar_lea.vmem %s4, %s255
          %s257 = smul.u32 3, %s22
        $region36: #{tpu_custom_call.1} parent=19 // pred_fallthru
          _
      $region20: #{tpu_custom_call.1} parent=5 // pred_fallthru
        _
      %p258 = scmp.le.s32.totalorder 1, %s14
      %p259 = scmp.lt.s32.totalorder %s14, 3
      %p260 = pnand %p258, %p259
      %p261 = pneg %p260
      // Predicated region
      $region37: #{tpu_custom_call.1} parent=5 // pred_check
        _
      $region38: #{tpu_custom_call.1} parent=5 // pred_check_branch
        %263 = sbr.rel (%p260) target = $region40
      $region39: #{tpu_custom_call.1} parent=5 // pred_region
        %s264 = ssub.s32 %s14, 1
        %s265 = smul.u32 3, %s26
        %p266 = scmp.lt.s32.totalorder %s24, 0
        %s267 = scalar_select %p266, %s24, 0
        %p268 = scmp.lt.s32.totalorder %s265, 2
        %s269 = scalar_select %p268, %s265, 2
        %s270 = smul.addr %s267, 3
        %s271 = sadd.s32 %s269, %s270
        %s272 = smul.addr %s271, 8
        %s273 = scalar_lea.vmem %s0, %s272
        %p274 = pneg %p61
        %p275 = pneg %p58
        %s276 = smul.u32 3, %s25
        %p277 = scmp.lt.s32.totalorder %s276, 5
        %s278 = scalar_select %p277, %s276, 5
        %s279 = smul.addr %s278, 8
        %s280 = scalar_lea.vmem %s1, %s279
        %p281 = pneg %p87
        %p282 = pneg %p84
        %p283 = scmp.lt.s32.totalorder %s25, 1
        %s284 = scalar_select %p283, %s25, 1
        %s285 = scalar_lea.vmem %s2, %s284
        %p286 = pneg %p113
        %p287 = pneg %p110
        %s288 = smul.u32 3, %s25
        %p289 = scmp.lt.s32.totalorder %s288, 5
        %s290 = scalar_select %p289, %s288, 5
        %s291 = smul.addr %s290, 8
        %s292 = scalar_lea.vmem %s3, %s291
        %p293 = pneg %p139
        %p294 = pneg %p136
        %s295 = smul.u32 3, %s25
        %p296 = scmp.lt.s32.totalorder %s295, 5
        %s297 = scalar_select %p296, %s295, 5
        %s298 = smul.addr %s297, 8
        %s299 = scalar_lea.vmem %s4, %s298
        %p300 = pneg %p165
        %p301 = pneg %p162
        %p302 = pneg %p193
        %p303 = pneg %p190
        %s304 = sand.u32 %s180, 1
        %s305 = scalar_lea.sflag [#allocation4], %s304
        %s306 = sand.u32 %s180, 1
        %s307 = smul.addr %s306, 8
        %s308 = scalar_lea.vmem [#allocation3], %s307
        %s309 = smul.u32 3, %s26
        %p310 = scmp.lt.s32.totalorder %s24, 0
        %s311 = scalar_select %p310, %s24, 0
        %p312 = scmp.lt.s32.totalorder %s309, 2
        %s313 = scalar_select %p312, %s309, 2
        %s314 = smul.addr %s311, 3
        %s315 = sadd.s32 %s313, %s314
        %s316 = smul.addr %s315, 8
        %s317 = scalar_lea.vmem %s0, %s316
        %s318 = smul.u32 3, %s26
        %s319 = smul.u32 3, %s25
        %p320 = scmp.lt.s32.totalorder %s319, 5
        %s321 = scalar_select %p320, %s319, 5
        %s322 = smul.addr %s321, 8
        %s323 = scalar_lea.vmem %s1, %s322
        %s324 = smul.u32 3, %s25
        %p325 = scmp.lt.s32.totalorder %s25, 1
        %s326 = scalar_select %p325, %s25, 1
        %s327 = scalar_lea.vmem %s2, %s326
        %s328 = smul.u32 3, %s25
        %p329 = scmp.lt.s32.totalorder %s328, 5
        %s330 = scalar_select %p329, %s328, 5
        %s331 = smul.addr %s330, 8
        %s332 = scalar_lea.vmem %s3, %s331
        %s333 = smul.u32 3, %s25
        %s334 = smul.u32 3, %s25
        %p335 = scmp.lt.s32.totalorder %s334, 5
        %s336 = scalar_select %p335, %s334, 5
        %s337 = smul.addr %s336, 8
        %s338 = scalar_lea.vmem %s4, %s337
        %s339 = smul.u32 3, %s25
        %v340 = vld [vmem:[%s317] sm:$0xff]
        %v341 = vld [vmem:[%s317 + $0x8] sm:$0xff]
        %v342 = vld [vmem:[%s317 + $0x10] sm:$0xff]
        %v343 = vld [vmem:[%s323] sm:$0xff]
        %v344 = vld [vmem:[%s323 + $0x8] sm:$0xff]
        %v345 = vld [vmem:[%s323 + $0x10] sm:$0xff]
        %v348 = vrot.slane %v341, 7
        %vm349 = vcmask 1040384
        %v350 = vsel %vm349, %v340, %v348
        %vm351 = vcmask 1041409
        %v352 = vsel %vm351, %v340, %v348
        %v353 = vrot.slane %v352, 1
        %vm354 = vcmask 1042434
        %v355 = vsel %vm354, %v340, %v348
        %v356 = vrot.slane %v355, 2
        %vm357 = vcmask 1043459
        %v358 = vsel %vm357, %v340, %v348
        %v359 = vrot.slane %v358, 3
        %vm360 = vcmask 1044484
        %v361 = vsel %vm360, %v340, %v348
        %v362 = vrot.slane %v361, 4
        %vm363 = vcmask 1045509
        %v364 = vsel %vm363, %v340, %v348
        %v365 = vrot.slane %v364, 5
        %vm366 = vcmask 1046534
        %v367 = vsel %vm366, %v340, %v348
        %v368 = vrot.slane %v367, 6
        %vm369 = vcmask 1046528
        %v370 = vsel %vm369, %v348, %v340
        %v371 = vrot.slane %v370, 7
        %v373 = vrot.slane %v342, 6
        %vm374 = vcmask 1041408
        %v375 = vsel %vm374, %v350, %v373
        %vm376 = vcmask 1042433
        %v377 = vsel %vm376, %v352, %v373
        %v378 = vrot.slane %v377, 1
        %vm379 = vcmask 1043458
        %v380 = vsel %vm379, %v355, %v373
        %v381 = vrot.slane %v380, 2
        %vm382 = vcmask 1044483
        %v383 = vsel %vm382, %v358, %v373
        %v384 = vrot.slane %v383, 3
        %vm385 = vcmask 1045508
        %v386 = vsel %vm385, %v361, %v373
        %v387 = vrot.slane %v386, 4
        %vm388 = vcmask 1046533
        %v389 = vsel %vm388, %v364, %v373
        %v390 = vrot.slane %v389, 5
        %vm391 = vcmask 1045504
        %v392 = vsel %vm391, %v373, %v367
        %v393 = vrot.slane %v392, 6
        %vm394 = vcmask 1046529
        %v395 = vsel %vm394, %v373, %v370
        %v396 = vrot.slane %v395, 7
        %v397 = vperm.slane %v350, 0
        %v398 = vperm.slane %v350, 1
        %v399 = vperm.slane %v353, 0
        %v400 = vperm.slane %v353, 1
        %v401 = vperm.slane %v356, 0
        %v402 = vperm.slane %v356, 1
        %v403 = vperm.slane %v359, 0
        %v404 = vperm.slane %v359, 1
        %v405 = vperm.slane %v362, 0
        %v406 = vperm.slane %v362, 1
        %v407 = vperm.slane %v365, 0
        %v408 = vperm.slane %v365, 1
        %v409 = vperm.slane %v368, 0
        %v410 = vperm.slane %v368, 1
        %v411 = vperm.slane %v371, 0
        %v412 = vperm.slane %v371, 1
        %v429 = vperm.slane %v375, 0
        %v430 = vperm.slane %v375, 1
        %v431 = vperm.slane %v375, 2
        %v432 = vperm.slane %v378, 0
        %v433 = vperm.slane %v378, 1
        %v434 = vperm.slane %v378, 2
        %v435 = vperm.slane %v381, 0
        %v436 = vperm.slane %v381, 1
        %v437 = vperm.slane %v381, 2
        %v438 = vperm.slane %v384, 0
        %v439 = vperm.slane %v384, 1
        %v440 = vperm.slane %v384, 2
        %v441 = vperm.slane %v387, 0
        %v442 = vperm.slane %v387, 1
        %v443 = vperm.slane %v387, 2
        %v444 = vperm.slane %v390, 0
        %v445 = vperm.slane %v390, 1
        %v446 = vperm.slane %v390, 2
        %v447 = vperm.slane %v393, 0
        %v448 = vperm.slane %v393, 1
        %v449 = vperm.slane %v393, 2
        %v450 = vperm.slane %v396, 0
        %v451 = vperm.slane %v396, 1
        %v452 = vperm.slane %v396, 2
        %453 = vrot.lane.b32.xlu0 %v429, 127
        %v454 = vpop.permute.xlu0 %453
        %455 = vrot.lane.b32.xlu0 %v430, 127
        %v456 = vpop.permute.xlu0 %455
        %457 = vrot.lane.b32.xlu0 %v431, 127
        %v458 = vpop.permute.xlu0 %457
        %459 = vrot.lane.b32.xlu0 %v432, 127
        %v460 = vpop.permute.xlu0 %459
        %461 = vrot.lane.b32.xlu0 %v433, 127
        %v462 = vpop.permute.xlu0 %461
        %463 = vrot.lane.b32.xlu0 %v434, 127
        %v464 = vpop.permute.xlu0 %463
        %465 = vrot.lane.b32.xlu0 %v435, 127
        %v466 = vpop.permute.xlu0 %465
        %467 = vrot.lane.b32.xlu0 %v436, 127
        %v468 = vpop.permute.xlu0 %467
        %469 = vrot.lane.b32.xlu0 %v437, 127
        %v470 = vpop.permute.xlu0 %469
        %471 = vrot.lane.b32.xlu0 %v438, 127
        %v472 = vpop.permute.xlu0 %471
        %473 = vrot.lane.b32.xlu0 %v439, 127
        %v474 = vpop.permute.xlu0 %473
        %475 = vrot.lane.b32.xlu0 %v440, 127
        %v476 = vpop.permute.xlu0 %475
        %477 = vrot.lane.b32.xlu0 %v441, 127
        %v478 = vpop.permute.xlu0 %477
        %479 = vrot.lane.b32.xlu0 %v442, 127
        %v480 = vpop.permute.xlu0 %479
        %481 = vrot.lane.b32.xlu0 %v443, 127
        %v482 = vpop.permute.xlu0 %481
        %483 = vrot.lane.b32.xlu0 %v444, 127
        %v484 = vpop.permute.xlu0 %483
        %485 = vrot.lane.b32.xlu0 %v445, 127
        %v486 = vpop.permute.xlu0 %485
        %487 = vrot.lane.b32.xlu0 %v446, 127
        %v488 = vpop.permute.xlu0 %487
        %489 = vrot.lane.b32.xlu0 %v447, 127
        %v490 = vpop.permute.xlu0 %489
        %491 = vrot.lane.b32.xlu0 %v448, 127
        %v492 = vpop.permute.xlu0 %491
        %493 = vrot.lane.b32.xlu0 %v449, 127
        %v494 = vpop.permute.xlu0 %493
        %495 = vrot.lane.b32.xlu0 %v450, 127
        %v496 = vpop.permute.xlu0 %495
        %497 = vrot.lane.b32.xlu0 %v451, 127
        %v498 = vpop.permute.xlu0 %497
        %499 = vrot.lane.b32.xlu0 %v452, 127
        %v500 = vpop.permute.xlu0 %499
        %vm501 = vcmask 1039360
        %v502 = vsel %vm501, %v454, %v456
        %v503 = vsel %vm501, %v456, %v458
        %v504 = vsel %vm501, %v460, %v462
        %v505 = vsel %vm501, %v462, %v464
        %v506 = vsel %vm501, %v466, %v468
        %v507 = vsel %vm501, %v468, %v470
        %v508 = vsel %vm501, %v472, %v474
        %v509 = vsel %vm501, %v474, %v476
        %v510 = vsel %vm501, %v478, %v480
        %v511 = vsel %vm501, %v480, %v482
        %v512 = vsel %vm501, %v484, %v486
        %v513 = vsel %vm501, %v486, %v488
        %v514 = vsel %vm501, %v490, %v492
        %v515 = vsel %vm501, %v492, %v494
        %v516 = vsel %vm501, %v496, %v498
        %v517 = vsel %vm501, %v498, %v500
        %534 = vrot.lane.b32.xlu0 %v429, 126
        %v535 = vpop.permute.xlu0 %534
        %536 = vrot.lane.b32.xlu0 %v430, 126
        %v537 = vpop.permute.xlu0 %536
        %538 = vrot.lane.b32.xlu0 %v431, 126
        %v539 = vpop.permute.xlu0 %538
        %540 = vrot.lane.b32.xlu0 %v432, 126
        %v541 = vpop.permute.xlu0 %540
        %542 = vrot.lane.b32.xlu0 %v433, 126
        %v543 = vpop.permute.xlu0 %542
        %544 = vrot.lane.b32.xlu0 %v434, 126
        %v545 = vpop.permute.xlu0 %544
        %546 = vrot.lane.b32.xlu0 %v435, 126
        %v547 = vpop.permute.xlu0 %546
        %548 = vrot.lane.b32.xlu0 %v436, 126
        %v549 = vpop.permute.xlu0 %548
        %550 = vrot.lane.b32.xlu0 %v437, 126
        %v551 = vpop.permute.xlu0 %550
        %552 = vrot.lane.b32.xlu0 %v438, 126
        %v553 = vpop.permute.xlu0 %552
        %554 = vrot.lane.b32.xlu0 %v439, 126
        %v555 = vpop.permute.xlu0 %554
        %556 = vrot.lane.b32.xlu0 %v440, 126
        %v557 = vpop.permute.xlu0 %556
        %558 = vrot.lane.b32.xlu0 %v441, 126
        %v559 = vpop.permute.xlu0 %558
        %560 = vrot.lane.b32.xlu0 %v442, 126
        %v561 = vpop.permute.xlu0 %560
        %562 = vrot.lane.b32.xlu0 %v443, 126
        %v563 = vpop.permute.xlu0 %562
        %564 = vrot.lane.b32.xlu0 %v444, 126
        %v565 = vpop.permute.xlu0 %564
        %566 = vrot.lane.b32.xlu0 %v445, 126
        %v567 = vpop.permute.xlu0 %566
        %568 = vrot.lane.b32.xlu0 %v446, 126
        %v569 = vpop.permute.xlu0 %568
        %570 = vrot.lane.b32.xlu0 %v447, 126
        %v571 = vpop.permute.xlu0 %570
        %572 = vrot.lane.b32.xlu0 %v448, 126
        %v573 = vpop.permute.xlu0 %572
        %574 = vrot.lane.b32.xlu0 %v449, 126
        %v575 = vpop.permute.xlu0 %574
        %576 = vrot.lane.b32.xlu0 %v450, 126
        %v577 = vpop.permute.xlu0 %576
        %578 = vrot.lane.b32.xlu0 %v451, 126
        %v579 = vpop.permute.xlu0 %578
        %580 = vrot.lane.b32.xlu0 %v452, 126
        %v581 = vpop.permute.xlu0 %580
        %vm582 = vcmask 1031168
        %v583 = vsel %vm582, %v535, %v537
        %v584 = vsel %vm582, %v537, %v539
        %v585 = vsel %vm582, %v541, %v543
        %v586 = vsel %vm582, %v543, %v545
        %v587 = vsel %vm582, %v547, %v549
        %v588 = vsel %vm582, %v549, %v551
        %v589 = vsel %vm582, %v553, %v555
        %v590 = vsel %vm582, %v555, %v557
        %v591 = vsel %vm582, %v559, %v561
        %v592 = vsel %vm582, %v561, %v563
        %v593 = vsel %vm582, %v565, %v567
        %v594 = vsel %vm582, %v567, %v569
        %v595 = vsel %vm582, %v571, %v573
        %v596 = vsel %vm582, %v573, %v575
        %v597 = vsel %vm582, %v577, %v579
        %v598 = vsel %vm582, %v579, %v581
        %615 = vrot.lane.b32.xlu0 %v429, 125
        %v616 = vpop.permute.xlu0 %615
        %617 = vrot.lane.b32.xlu0 %v430, 125
        %v618 = vpop.permute.xlu0 %617
        %619 = vrot.lane.b32.xlu0 %v431, 125
        %v620 = vpop.permute.xlu0 %619
        %621 = vrot.lane.b32.xlu0 %v432, 125
        %v622 = vpop.permute.xlu0 %621
        %623 = vrot.lane.b32.xlu0 %v433, 125
        %v624 = vpop.permute.xlu0 %623
        %625 = vrot.lane.b32.xlu0 %v434, 125
        %v626 = vpop.permute.xlu0 %625
        %627 = vrot.lane.b32.xlu0 %v435, 125
        %v628 = vpop.permute.xlu0 %627
        %629 = vrot.lane.b32.xlu0 %v436, 125
        %v630 = vpop.permute.xlu0 %629
        %631 = vrot.lane.b32.xlu0 %v437, 125
        %v632 = vpop.permute.xlu0 %631
        %633 = vrot.lane.b32.xlu0 %v438, 125
        %v634 = vpop.permute.xlu0 %633
        %635 = vrot.lane.b32.xlu0 %v439, 125
        %v636 = vpop.permute.xlu0 %635
        %637 = vrot.lane.b32.xlu0 %v440, 125
        %v638 = vpop.permute.xlu0 %637
        %639 = vrot.lane.b32.xlu0 %v441, 125
        %v640 = vpop.permute.xlu0 %639
        %641 = vrot.lane.b32.xlu0 %v442, 125
        %v642 = vpop.permute.xlu0 %641
        %643 = vrot.lane.b32.xlu0 %v443, 125
        %v644 = vpop.permute.xlu0 %643
        %645 = vrot.lane.b32.xlu0 %v444, 125
        %v646 = vpop.permute.xlu0 %645
        %647 = vrot.lane.b32.xlu0 %v445, 125
        %v648 = vpop.permute.xlu0 %647
        %649 = vrot.lane.b32.xlu0 %v446, 125
        %v650 = vpop.permute.xlu0 %649
        %651 = vrot.lane.b32.xlu0 %v447, 125
        %v652 = vpop.permute.xlu0 %651
        %653 = vrot.lane.b32.xlu0 %v448, 125
        %v654 = vpop.permute.xlu0 %653
        %655 = vrot.lane.b32.xlu0 %v449, 125
        %v656 = vpop.permute.xlu0 %655
        %657 = vrot.lane.b32.xlu0 %v450, 125
        %v658 = vpop.permute.xlu0 %657
        %659 = vrot.lane.b32.xlu0 %v451, 125
        %v660 = vpop.permute.xlu0 %659
        %661 = vrot.lane.b32.xlu0 %v452, 125
        %v662 = vpop.permute.xlu0 %661
        %vm663 = vcmask 1022976
        %v664 = vsel %vm663, %v616, %v618
        %v665 = vsel %vm663, %v618, %v620
        %v666 = vsel %vm663, %v622, %v624
        %v667 = vsel %vm663, %v624, %v626
        %v668 = vsel %vm663, %v628, %v630
        %v669 = vsel %vm663, %v630, %v632
        %v670 = vsel %vm663, %v634, %v636
        %v671 = vsel %vm663, %v636, %v638
        %v672 = vsel %vm663, %v640, %v642
        %v673 = vsel %vm663, %v642, %v644
        %v674 = vsel %vm663, %v646, %v648
        %v675 = vsel %vm663, %v648, %v650
        %v676 = vsel %vm663, %v652, %v654
        %v677 = vsel %vm663, %v654, %v656
        %v678 = vsel %vm663, %v658, %v660
        %v679 = vsel %vm663, %v660, %v662
        %696 = vrot.lane.b32.xlu0 %v429, 124
        %v697 = vpop.permute.xlu0 %696
        %698 = vrot.lane.b32.xlu0 %v430, 124
        %v699 = vpop.permute.xlu0 %698
        %700 = vrot.lane.b32.xlu0 %v431, 124
        %v701 = vpop.permute.xlu0 %700
        %702 = vrot.lane.b32.xlu0 %v432, 124
        %v703 = vpop.permute.xlu0 %702
        %704 = vrot.lane.b32.xlu0 %v433, 124
        %v705 = vpop.permute.xlu0 %704
        %706 = vrot.lane.b32.xlu0 %v434, 124
        %v707 = vpop.permute.xlu0 %706
        %708 = vrot.lane.b32.xlu0 %v435, 124
        %v709 = vpop.permute.xlu0 %708
        %710 = vrot.lane.b32.xlu0 %v436, 124
        %v711 = vpop.permute.xlu0 %710
        %712 = vrot.lane.b32.xlu0 %v437, 124
        %v713 = vpop.permute.xlu0 %712
        %714 = vrot.lane.b32.xlu0 %v438, 124
        %v715 = vpop.permute.xlu0 %714
        %716 = vrot.lane.b32.xlu0 %v439, 124
        %v717 = vpop.permute.xlu0 %716
        %718 = vrot.lane.b32.xlu0 %v440, 124
        %v719 = vpop.permute.xlu0 %718
        %720 = vrot.lane.b32.xlu0 %v441, 124
        %v721 = vpop.permute.xlu0 %720
        %722 = vrot.lane.b32.xlu0 %v442, 124
        %v723 = vpop.permute.xlu0 %722
        %724 = vrot.lane.b32.xlu0 %v443, 124
        %v725 = vpop.permute.xlu0 %724
        %726 = vrot.lane.b32.xlu0 %v444, 124
        %v727 = vpop.permute.xlu0 %726
        %728 = vrot.lane.b32.xlu0 %v445, 124
        %v729 = vpop.permute.xlu0 %728
        %730 = vrot.lane.b32.xlu0 %v446, 124
        %v731 = vpop.permute.xlu0 %730
        %732 = vrot.lane.b32.xlu0 %v447, 124
        %v733 = vpop.permute.xlu0 %732
        %734 = vrot.lane.b32.xlu0 %v448, 124
        %v735 = vpop.permute.xlu0 %734
        %736 = vrot.lane.b32.xlu0 %v449, 124
        %v737 = vpop.permute.xlu0 %736
        %738 = vrot.lane.b32.xlu0 %v450, 124
        %v739 = vpop.permute.xlu0 %738
        %740 = vrot.lane.b32.xlu0 %v451, 124
        %v741 = vpop.permute.xlu0 %740
        %742 = vrot.lane.b32.xlu0 %v452, 124
        %v743 = vpop.permute.xlu0 %742
        %vm744 = vcmask 1014784
        %v745 = vsel %vm744, %v697, %v699
        %v746 = vsel %vm744, %v699, %v701
        %v747 = vsel %vm744, %v703, %v705
        %v748 = vsel %vm744, %v705, %v707
        %v749 = vsel %vm744, %v709, %v711
        %v750 = vsel %vm744, %v711, %v713
        %v751 = vsel %vm744, %v715, %v717
        %v752 = vsel %vm744, %v717, %v719
        %v753 = vsel %vm744, %v721, %v723
        %v754 = vsel %vm744, %v723, %v725
        %v755 = vsel %vm744, %v727, %v729
        %v756 = vsel %vm744, %v729, %v731
        %v757 = vsel %vm744, %v733, %v735
        %v758 = vsel %vm744, %v735, %v737
        %v759 = vsel %vm744, %v739, %v741
        %v760 = vsel %vm744, %v741, %v743
        %777 = vrot.lane.b32.xlu0 %v429, 123
        %v778 = vpop.permute.xlu0 %777
        %779 = vrot.lane.b32.xlu0 %v430, 123
        %v780 = vpop.permute.xlu0 %779
        %781 = vrot.lane.b32.xlu0 %v431, 123
        %v782 = vpop.permute.xlu0 %781
        %783 = vrot.lane.b32.xlu0 %v432, 123
        %v784 = vpop.permute.xlu0 %783
        %785 = vrot.lane.b32.xlu0 %v433, 123
        %v786 = vpop.permute.xlu0 %785
        %787 = vrot.lane.b32.xlu0 %v434, 123
        %v788 = vpop.permute.xlu0 %787
        %789 = vrot.lane.b32.xlu0 %v435, 123
        %v790 = vpop.permute.xlu0 %789
        %791 = vrot.lane.b32.xlu0 %v436, 123
        %v792 = vpop.permute.xlu0 %791
        %793 = vrot.lane.b32.xlu0 %v437, 123
        %v794 = vpop.permute.xlu0 %793
        %795 = vrot.lane.b32.xlu0 %v438, 123
        %v796 = vpop.permute.xlu0 %795
        %797 = vrot.lane.b32.xlu0 %v439, 123
        %v798 = vpop.permute.xlu0 %797
        %799 = vrot.lane.b32.xlu0 %v440, 123
        %v800 = vpop.permute.xlu0 %799
        %801 = vrot.lane.b32.xlu0 %v441, 123
        %v802 = vpop.permute.xlu0 %801
        %803 = vrot.lane.b32.xlu0 %v442, 123
        %v804 = vpop.permute.xlu0 %803
        %805 = vrot.lane.b32.xlu0 %v443, 123
        %v806 = vpop.permute.xlu0 %805
        %807 = vrot.lane.b32.xlu0 %v444, 123
        %v808 = vpop.permute.xlu0 %807
        %809 = vrot.lane.b32.xlu0 %v445, 123
        %v810 = vpop.permute.xlu0 %809
        %811 = vrot.lane.b32.xlu0 %v446, 123
        %v812 = vpop.permute.xlu0 %811
        %813 = vrot.lane.b32.xlu0 %v447, 123
        %v814 = vpop.permute.xlu0 %813
        %815 = vrot.lane.b32.xlu0 %v448, 123
        %v816 = vpop.permute.xlu0 %815
        %817 = vrot.lane.b32.xlu0 %v449, 123
        %v818 = vpop.permute.xlu0 %817
        %819 = vrot.lane.b32.xlu0 %v450, 123
        %v820 = vpop.permute.xlu0 %819
        %821 = vrot.lane.b32.xlu0 %v451, 123
        %v822 = vpop.permute.xlu0 %821
        %823 = vrot.lane.b32.xlu0 %v452, 123
        %v824 = vpop.permute.xlu0 %823
        %vm825 = vcmask 1006592
        %v826 = vsel %vm825, %v778, %v780
        %v827 = vsel %vm825, %v780, %v782
        %v828 = vsel %vm825, %v784, %v786
        %v829 = vsel %vm825, %v786, %v788
        %v830 = vsel %vm825, %v790, %v792
        %v831 = vsel %vm825, %v792, %v794
        %v832 = vsel %vm825, %v796, %v798
        %v833 = vsel %vm825, %v798, %v800
        %v834 = vsel %vm825, %v802, %v804
        %v835 = vsel %vm825, %v804, %v806
        %v836 = vsel %vm825, %v808, %v810
        %v837 = vsel %vm825, %v810, %v812
        %v838 = vsel %vm825, %v814, %v816
        %v839 = vsel %vm825, %v816, %v818
        %v840 = vsel %vm825, %v820, %v822
        %v841 = vsel %vm825, %v822, %v824
        %858 = vrot.lane.b32.xlu0 %v429, 122
        %v859 = vpop.permute.xlu0 %858
        %860 = vrot.lane.b32.xlu0 %v430, 122
        %v861 = vpop.permute.xlu0 %860
        %862 = vrot.lane.b32.xlu0 %v431, 122
        %v863 = vpop.permute.xlu0 %862
        %864 = vrot.lane.b32.xlu0 %v432, 122
        %v865 = vpop.permute.xlu0 %864
        %866 = vrot.lane.b32.xlu0 %v433, 122
        %v867 = vpop.permute.xlu0 %866
        %868 = vrot.lane.b32.xlu0 %v434, 122
        %v869 = vpop.permute.xlu0 %868
        %870 = vrot.lane.b32.xlu0 %v435, 122
        %v871 = vpop.permute.xlu0 %870
        %872 = vrot.lane.b32.xlu0 %v436, 122
        %v873 = vpop.permute.xlu0 %872
        %874 = vrot.lane.b32.xlu0 %v437, 122
        %v875 = vpop.permute.xlu0 %874
        %876 = vrot.lane.b32.xlu0 %v438, 122
        %v877 = vpop.permute.xlu0 %876
        %878 = vrot.lane.b32.xlu0 %v439, 122
        %v879 = vpop.permute.xlu0 %878
        %880 = vrot.lane.b32.xlu0 %v440, 122
        %v881 = vpop.permute.xlu0 %880
        %882 = vrot.lane.b32.xlu0 %v441, 122
        %v883 = vpop.permute.xlu0 %882
        %884 = vrot.lane.b32.xlu0 %v442, 122
        %v885 = vpop.permute.xlu0 %884
        %886 = vrot.lane.b32.xlu0 %v443, 122
        %v887 = vpop.permute.xlu0 %886
        %888 = vrot.lane.b32.xlu0 %v444, 122
        %v889 = vpop.permute.xlu0 %888
        %890 = vrot.lane.b32.xlu0 %v445, 122
        %v891 = vpop.permute.xlu0 %890
        %892 = vrot.lane.b32.xlu0 %v446, 122
        %v893 = vpop.permute.xlu0 %892
        %894 = vrot.lane.b32.xlu0 %v447, 122
        %v895 = vpop.permute.xlu0 %894
        %896 = vrot.lane.b32.xlu0 %v448, 122
        %v897 = vpop.permute.xlu0 %896
        %898 = vrot.lane.b32.xlu0 %v449, 122
        %v899 = vpop.permute.xlu0 %898
        %900 = vrot.lane.b32.xlu0 %v450, 122
        %v901 = vpop.permute.xlu0 %900
        %902 = vrot.lane.b32.xlu0 %v451, 122
        %v903 = vpop.permute.xlu0 %902
        %904 = vrot.lane.b32.xlu0 %v452, 122
        %v905 = vpop.permute.xlu0 %904
        %vm906 = vcmask 998400
        %v907 = vsel %vm906, %v859, %v861
        %v908 = vsel %vm906, %v861, %v863
        %v909 = vsel %vm906, %v865, %v867
        %v910 = vsel %vm906, %v867, %v869
        %v911 = vsel %vm906, %v871, %v873
        %v912 = vsel %vm906, %v873, %v875
        %v913 = vsel %vm906, %v877, %v879
        %v914 = vsel %vm906, %v879, %v881
        %v915 = vsel %vm906, %v883, %v885
        %v916 = vsel %vm906, %v885, %v887
        %v917 = vsel %vm906, %v889, %v891
        %v918 = vsel %vm906, %v891, %v893
        %v919 = vsel %vm906, %v895, %v897
        %v920 = vsel %vm906, %v897, %v899
        %v921 = vsel %vm906, %v901, %v903
        %v922 = vsel %vm906, %v903, %v905
        %939 = vrot.lane.b32.xlu0 %v429, 121
        %v940 = vpop.permute.xlu0 %939
        %941 = vrot.lane.b32.xlu0 %v430, 121
        %v942 = vpop.permute.xlu0 %941
        %943 = vrot.lane.b32.xlu0 %v431, 121
        %v944 = vpop.permute.xlu0 %943
        %945 = vrot.lane.b32.xlu0 %v432, 121
        %v946 = vpop.permute.xlu0 %945
        %947 = vrot.lane.b32.xlu0 %v433, 121
        %v948 = vpop.permute.xlu0 %947
        %949 = vrot.lane.b32.xlu0 %v434, 121
        %v950 = vpop.permute.xlu0 %949
        %951 = vrot.lane.b32.xlu0 %v435, 121
        %v952 = vpop.permute.xlu0 %951
        %953 = vrot.lane.b32.xlu0 %v436, 121
        %v954 = vpop.permute.xlu0 %953
        %955 = vrot.lane.b32.xlu0 %v437, 121
        %v956 = vpop.permute.xlu0 %955
        %957 = vrot.lane.b32.xlu0 %v438, 121
        %v958 = vpop.permute.xlu0 %957
        %959 = vrot.lane.b32.xlu0 %v439, 121
        %v960 = vpop.permute.xlu0 %959
        %961 = vrot.lane.b32.xlu0 %v440, 121
        %v962 = vpop.permute.xlu0 %961
        %963 = vrot.lane.b32.xlu0 %v441, 121
        %v964 = vpop.permute.xlu0 %963
        %965 = vrot.lane.b32.xlu0 %v442, 121
        %v966 = vpop.permute.xlu0 %965
        %967 = vrot.lane.b32.xlu0 %v443, 121
        %v968 = vpop.permute.xlu0 %967
        %969 = vrot.lane.b32.xlu0 %v444, 121
        %v970 = vpop.permute.xlu0 %969
        %971 = vrot.lane.b32.xlu0 %v445, 121
        %v972 = vpop.permute.xlu0 %971
        %973 = vrot.lane.b32.xlu0 %v446, 121
        %v974 = vpop.permute.xlu0 %973
        %975 = vrot.lane.b32.xlu0 %v447, 121
        %v976 = vpop.permute.xlu0 %975
        %977 = vrot.lane.b32.xlu0 %v448, 121
        %v978 = vpop.permute.xlu0 %977
        %979 = vrot.lane.b32.xlu0 %v449, 121
        %v980 = vpop.permute.xlu0 %979
        %981 = vrot.lane.b32.xlu0 %v450, 121
        %v982 = vpop.permute.xlu0 %981
        %983 = vrot.lane.b32.xlu0 %v451, 121
        %v984 = vpop.permute.xlu0 %983
        %985 = vrot.lane.b32.xlu0 %v452, 121
        %v986 = vpop.permute.xlu0 %985
        %vm987 = vcmask 990208
        %v988 = vsel %vm987, %v940, %v942
        %v989 = vsel %vm987, %v942, %v944
        %v990 = vsel %vm987, %v946, %v948
        %v991 = vsel %vm987, %v948, %v950
        %v992 = vsel %vm987, %v952, %v954
        %v993 = vsel %vm987, %v954, %v956
        %v994 = vsel %vm987, %v958, %v960
        %v995 = vsel %vm987, %v960, %v962
        %v996 = vsel %vm987, %v964, %v966
        %v997 = vsel %vm987, %v966, %v968
        %v998 = vsel %vm987, %v970, %v972
        %v999 = vsel %vm987, %v972, %v974
        %v1000 = vsel %vm987, %v976, %v978
        %v1001 = vsel %vm987, %v978, %v980
        %v1002 = vsel %vm987, %v982, %v984
        %v1003 = vsel %vm987, %v984, %v986
        %v1020 = vsel %vm349, %v397, %v502
        %v1021 = vsel %vm349, %v398, %v503
        %v1022 = vsel %vm349, %v399, %v504
        %v1023 = vsel %vm349, %v400, %v505
        %v1024 = vsel %vm349, %v401, %v506
        %v1025 = vsel %vm349, %v402, %v507
        %v1026 = vsel %vm349, %v403, %v508
        %v1027 = vsel %vm349, %v404, %v509
        %v1028 = vsel %vm349, %v405, %v510
        %v1029 = vsel %vm349, %v406, %v511
        %v1030 = vsel %vm349, %v407, %v512
        %v1031 = vsel %vm349, %v408, %v513
        %v1032 = vsel %vm349, %v409, %v514
        %v1033 = vsel %vm349, %v410, %v515
        %v1034 = vsel %vm349, %v411, %v516
        %v1035 = vsel %vm349, %v412, %v517
        %v1036 = vsel %vm374, %v1020, %v583
        %v1037 = vsel %vm374, %v1021, %v584
        %v1038 = vsel %vm374, %v1022, %v585
        %v1039 = vsel %vm374, %v1023, %v586
        %v1040 = vsel %vm374, %v1024, %v587
        %v1041 = vsel %vm374, %v1025, %v588
        %v1042 = vsel %vm374, %v1026, %v589
        %v1043 = vsel %vm374, %v1027, %v590
        %v1044 = vsel %vm374, %v1028, %v591
        %v1045 = vsel %vm374, %v1029, %v592
        %v1046 = vsel %vm374, %v1030, %v593
        %v1047 = vsel %vm374, %v1031, %v594
        %v1048 = vsel %vm374, %v1032, %v595
        %v1049 = vsel %vm374, %v1033, %v596
        %v1050 = vsel %vm374, %v1034, %v597
        %v1051 = vsel %vm374, %v1035, %v598
        %vm1052 = vcmask 1042432
        %v1053 = vsel %vm1052, %v1036, %v664
        %v1054 = vsel %vm1052, %v1037, %v665
        %v1055 = vsel %vm1052, %v1038, %v666
        %v1056 = vsel %vm1052, %v1039, %v667
        %v1057 = vsel %vm1052, %v1040, %v668
        %v1058 = vsel %vm1052, %v1041, %v669
        %v1059 = vsel %vm1052, %v1042, %v670
        %v1060 = vsel %vm1052, %v1043, %v671
        %v1061 = vsel %vm1052, %v1044, %v672
        %v1062 = vsel %vm1052, %v1045, %v673
        %v1063 = vsel %vm1052, %v1046, %v674
        %v1064 = vsel %vm1052, %v1047, %v675
        %v1065 = vsel %vm1052, %v1048, %v676
        %v1066 = vsel %vm1052, %v1049, %v677
        %v1067 = vsel %vm1052, %v1050, %v678
        %v1068 = vsel %vm1052, %v1051, %v679
        %vm1069 = vcmask 1043456
        %v1070 = vsel %vm1069, %v1053, %v745
        %v1071 = vsel %vm1069, %v1054, %v746
        %v1072 = vsel %vm1069, %v1055, %v747
        %v1073 = vsel %vm1069, %v1056, %v748
        %v1074 = vsel %vm1069, %v1057, %v749
        %v1075 = vsel %vm1069, %v1058, %v750
        %v1076 = vsel %vm1069, %v1059, %v751
        %v1077 = vsel %vm1069, %v1060, %v752
        %v1078 = vsel %vm1069, %v1061, %v753
        %v1079 = vsel %vm1069, %v1062, %v754
        %v1080 = vsel %vm1069, %v1063, %v755
        %v1081 = vsel %vm1069, %v1064, %v756
        %v1082 = vsel %vm1069, %v1065, %v757
        %v1083 = vsel %vm1069, %v1066, %v758
        %v1084 = vsel %vm1069, %v1067, %v759
        %v1085 = vsel %vm1069, %v1068, %v760
        %vm1086 = vcmask 1044480
        %v1087 = vsel %vm1086, %v1070, %v826
        %v1088 = vsel %vm1086, %v1071, %v827
        %v1089 = vsel %vm1086, %v1072, %v828
        %v1090 = vsel %vm1086, %v1073, %v829
        %v1091 = vsel %vm1086, %v1074, %v830
        %v1092 = vsel %vm1086, %v1075, %v831
        %v1093 = vsel %vm1086, %v1076, %v832
        %v1094 = vsel %vm1086, %v1077, %v833
        %v1095 = vsel %vm1086, %v1078, %v834
        %v1096 = vsel %vm1086, %v1079, %v835
        %v1097 = vsel %vm1086, %v1080, %v836
        %v1098 = vsel %vm1086, %v1081, %v837
        %v1099 = vsel %vm1086, %v1082, %v838
        %v1100 = vsel %vm1086, %v1083, %v839
        %v1101 = vsel %vm1086, %v1084, %v840
        %v1102 = vsel %vm1086, %v1085, %v841
        %v1103 = vsel %vm391, %v1087, %v907
        %v1104 = vsel %vm391, %v1088, %v908
        %v1105 = vsel %vm391, %v1089, %v909
        %v1106 = vsel %vm391, %v1090, %v910
        %v1107 = vsel %vm391, %v1091, %v911
        %v1108 = vsel %vm391, %v1092, %v912
        %v1109 = vsel %vm391, %v1093, %v913
        %v1110 = vsel %vm391, %v1094, %v914
        %v1111 = vsel %vm391, %v1095, %v915
        %v1112 = vsel %vm391, %v1096, %v916
        %v1113 = vsel %vm391, %v1097, %v917
        %v1114 = vsel %vm391, %v1098, %v918
        %v1115 = vsel %vm391, %v1099, %v919
        %v1116 = vsel %vm391, %v1100, %v920
        %v1117 = vsel %vm391, %v1101, %v921
        %v1118 = vsel %vm391, %v1102, %v922
        %v1119 = vsel %vm369, %v1103, %v988
        %v1120 = vsel %vm369, %v1104, %v989
        %v1121 = vsel %vm369, %v1105, %v990
        %v1122 = vsel %vm369, %v1106, %v991
        %v1123 = vsel %vm369, %v1107, %v992
        %v1124 = vsel %vm369, %v1108, %v993
        %v1125 = vsel %vm369, %v1109, %v994
        %v1126 = vsel %vm369, %v1110, %v995
        %v1127 = vsel %vm369, %v1111, %v996
        %v1128 = vsel %vm369, %v1112, %v997
        %v1129 = vsel %vm369, %v1113, %v998
        %v1130 = vsel %vm369, %v1114, %v999
        %v1131 = vsel %vm369, %v1115, %v1000
        %v1132 = vsel %vm369, %v1116, %v1001
        %v1133 = vsel %vm369, %v1117, %v1002
        %v1134 = vsel %vm369, %v1118, %v1003
        %vm1135 = vcmask 64512
        %v1137 = vsel %vm1135, %v343, 0
        %v1140 = vsel %vm1135, %v344, 0
        %v1143 = vsel %vm1135, %v345, 0
        %1145 = vmatpush.msra.mxu0 0.0
        %1146 = vmatpush.msra.mxu0 0.0
        %1147 = vmatpush.msra.mxu0 0.0
        %1148 = vmatpush.msra.mxu0 0.0
        %1149 = vmatpush.msra.mxu0 0.0
        %1150 = vmatpush.msra.mxu0 0.0
        %1151 = vmatpush.msra.mxu0 0.0
        %1152 = vmatpush.msra.mxu0 0.0
        %1153 = vmatpush.msra.mxu0 0.0
        %1154 = vmatpush.msra.mxu0 0.0
        %1155 = vmatpush.msra.mxu0 0.0
        %1156 = vmatpush.msra.mxu0 0.0
        %1157 = vmatpush.msra.mxu0 0.0
        %1158 = vmatpush.msra.mxu0 0.0
        %1159 = vmatpush.msra.mxu0 0.0
        %1160 = vmatpush.msra.mxu0 %v1119
        %1161 = vmatmul.f32.gmra.mxu0 %v1137
        %v1162 = vpop.f32.mrf.mxu0
        %v1163 = vadd.f32 0.0, %v1162
        %1164 = vmatmul.f32.gmra.mxu0 %v1140
        %v1165 = vpop.f32.mrf.mxu0
        %v1166 = vadd.f32 0.0, %v1165
        %1167 = vmatmul.f32.gmra.mxu0 %v1143
        %v1168 = vpop.f32.mrf.mxu0
        %v1169 = vadd.f32 0.0, %v1168
        %1170 = vdwg.mxu0
        %1171 = vmatpush.msra.mxu0 0.0
        %1172 = vmatpush.msra.mxu0 0.0
        %1173 = vmatpush.msra.mxu0 0.0
        %1174 = vmatpush.msra.mxu0 0.0
        %1175 = vmatpush.msra.mxu0 0.0
        %1176 = vmatpush.msra.mxu0 0.0
        %1177 = vmatpush.msra.mxu0 0.0
        %1178 = vmatpush.msra.mxu0 0.0
        %1179 = vmatpush.msra.mxu0 0.0
        %1180 = vmatpush.msra.mxu0 0.0
        %1181 = vmatpush.msra.mxu0 0.0
        %1182 = vmatpush.msra.mxu0 0.0
        %1183 = vmatpush.msra.mxu0 0.0
        %1184 = vmatpush.msra.mxu0 0.0
        %1185 = vmatpush.msra.mxu0 0.0
        %1186 = vmatpush.msra.mxu0 %v1120
        %1187 = vmatmul.f32.gmra.mxu0 %v1137
        %v1188 = vpop.f32.mrf.mxu0
        %v1189 = vadd.f32 0.0, %v1188
        %1190 = vmatmul.f32.gmra.mxu0 %v1140
        %v1191 = vpop.f32.mrf.mxu0
        %v1192 = vadd.f32 0.0, %v1191
        %1193 = vmatmul.f32.gmra.mxu0 %v1143
        %v1194 = vpop.f32.mrf.mxu0
        %v1195 = vadd.f32 0.0, %v1194
        %1196 = vdwg.mxu0
        %1197 = vmatpush.msra.mxu0 0.0
        %1198 = vmatpush.msra.mxu0 0.0
        %1199 = vmatpush.msra.mxu0 0.0
        %1200 = vmatpush.msra.mxu0 0.0
        %1201 = vmatpush.msra.mxu0 0.0
        %1202 = vmatpush.msra.mxu0 0.0
        %1203 = vmatpush.msra.mxu0 0.0
        %1204 = vmatpush.msra.mxu0 0.0
        %1205 = vmatpush.msra.mxu0 0.0
        %1206 = vmatpush.msra.mxu0 0.0
        %1207 = vmatpush.msra.mxu0 0.0
        %1208 = vmatpush.msra.mxu0 0.0
        %1209 = vmatpush.msra.mxu0 0.0
        %1210 = vmatpush.msra.mxu0 0.0
        %1211 = vmatpush.msra.mxu0 0.0
        %1212 = vmatpush.msra.mxu0 %v1121
        %1213 = vmatmul.f32.gmra.mxu0 %v1137
        %v1214 = vpop.f32.mrf.mxu0
        %v1215 = vadd.f32 0.0, %v1214
        %1216 = vmatmul.f32.gmra.mxu0 %v1140
        %v1217 = vpop.f32.mrf.mxu0
        %v1218 = vadd.f32 0.0, %v1217
        %1219 = vmatmul.f32.gmra.mxu0 %v1143
        %v1220 = vpop.f32.mrf.mxu0
        %v1221 = vadd.f32 0.0, %v1220
        %1222 = vdwg.mxu0
        %1223 = vmatpush.msra.mxu0 0.0
        %1224 = vmatpush.msra.mxu0 0.0
        %1225 = vmatpush.msra.mxu0 0.0
        %1226 = vmatpush.msra.mxu0 0.0
        %1227 = vmatpush.msra.mxu0 0.0
        %1228 = vmatpush.msra.mxu0 0.0
        %1229 = vmatpush.msra.mxu0 0.0
        %1230 = vmatpush.msra.mxu0 0.0
        %1231 = vmatpush.msra.mxu0 0.0
        %1232 = vmatpush.msra.mxu0 0.0
        %1233 = vmatpush.msra.mxu0 0.0
        %1234 = vmatpush.msra.mxu0 0.0
        %1235 = vmatpush.msra.mxu0 0.0
        %1236 = vmatpush.msra.mxu0 0.0
        %1237 = vmatpush.msra.mxu0 0.0
        %1238 = vmatpush.msra.mxu0 %v1122
        %1239 = vmatmul.f32.gmra.mxu0 %v1137
        %v1240 = vpop.f32.mrf.mxu0
        %v1241 = vadd.f32 0.0, %v1240
        %1242 = vmatmul.f32.gmra.mxu0 %v1140
        %v1243 = vpop.f32.mrf.mxu0
        %v1244 = vadd.f32 0.0, %v1243
        %1245 = vmatmul.f32.gmra.mxu0 %v1143
        %v1246 = vpop.f32.mrf.mxu0
        %v1247 = vadd.f32 0.0, %v1246
        %1248 = vdwg.mxu0
        %1249 = vmatpush.msra.mxu0 0.0
        %1250 = vmatpush.msra.mxu0 0.0
        %1251 = vmatpush.msra.mxu0 0.0
        %1252 = vmatpush.msra.mxu0 0.0
        %1253 = vmatpush.msra.mxu0 0.0
        %1254 = vmatpush.msra.mxu0 0.0
        %1255 = vmatpush.msra.mxu0 0.0
        %1256 = vmatpush.msra.mxu0 0.0
        %1257 = vmatpush.msra.mxu0 0.0
        %1258 = vmatpush.msra.mxu0 0.0
        %1259 = vmatpush.msra.mxu0 0.0
        %1260 = vmatpush.msra.mxu0 0.0
        %1261 = vmatpush.msra.mxu0 0.0
        %1262 = vmatpush.msra.mxu0 0.0
        %1263 = vmatpush.msra.mxu0 0.0
        %1264 = vmatpush.msra.mxu0 %v1123
        %1265 = vmatmul.f32.gmra.mxu0 %v1137
        %v1266 = vpop.f32.mrf.mxu0
        %v1267 = vadd.f32 0.0, %v1266
        %1268 = vmatmul.f32.gmra.mxu0 %v1140
        %v1269 = vpop.f32.mrf.mxu0
        %v1270 = vadd.f32 0.0, %v1269
        %1271 = vmatmul.f32.gmra.mxu0 %v1143
        %v1272 = vpop.f32.mrf.mxu0
        %v1273 = vadd.f32 0.0, %v1272
        %1274 = vdwg.mxu0
        %1275 = vmatpush.msra.mxu0 0.0
        %1276 = vmatpush.msra.mxu0 0.0
        %1277 = vmatpush.msra.mxu0 0.0
        %1278 = vmatpush.msra.mxu0 0.0
        %1279 = vmatpush.msra.mxu0 0.0
        %1280 = vmatpush.msra.mxu0 0.0
        %1281 = vmatpush.msra.mxu0 0.0
        %1282 = vmatpush.msra.mxu0 0.0
        %1283 = vmatpush.msra.mxu0 0.0
        %1284 = vmatpush.msra.mxu0 0.0
        %1285 = vmatpush.msra.mxu0 0.0
        %1286 = vmatpush.msra.mxu0 0.0
        %1287 = vmatpush.msra.mxu0 0.0
        %1288 = vmatpush.msra.mxu0 0.0
        %1289 = vmatpush.msra.mxu0 0.0
        %1290 = vmatpush.msra.mxu0 %v1124
        %1291 = vmatmul.f32.gmra.mxu0 %v1137
        %v1292 = vpop.f32.mrf.mxu0
        %v1293 = vadd.f32 0.0, %v1292
        %1294 = vmatmul.f32.gmra.mxu0 %v1140
        %v1295 = vpop.f32.mrf.mxu0
        %v1296 = vadd.f32 0.0, %v1295
        %1297 = vmatmul.f32.gmra.mxu0 %v1143
        %v1298 = vpop.f32.mrf.mxu0
        %v1299 = vadd.f32 0.0, %v1298
        %1300 = vdwg.mxu0
        %1301 = vmatpush.msra.mxu0 0.0
        %1302 = vmatpush.msra.mxu0 0.0
        %1303 = vmatpush.msra.mxu0 0.0
        %1304 = vmatpush.msra.mxu0 0.0
        %1305 = vmatpush.msra.mxu0 0.0
        %1306 = vmatpush.msra.mxu0 0.0
        %1307 = vmatpush.msra.mxu0 0.0
        %1308 = vmatpush.msra.mxu0 0.0
        %1309 = vmatpush.msra.mxu0 0.0
        %1310 = vmatpush.msra.mxu0 0.0
        %1311 = vmatpush.msra.mxu0 0.0
        %1312 = vmatpush.msra.mxu0 0.0
        %1313 = vmatpush.msra.mxu0 0.0
        %1314 = vmatpush.msra.mxu0 0.0
        %1315 = vmatpush.msra.mxu0 0.0
        %1316 = vmatpush.msra.mxu0 %v1125
        %1317 = vmatmul.f32.gmra.mxu0 %v1137
        %v1318 = vpop.f32.mrf.mxu0
        %v1319 = vadd.f32 0.0, %v1318
        %1320 = vmatmul.f32.gmra.mxu0 %v1140
        %v1321 = vpop.f32.mrf.mxu0
        %v1322 = vadd.f32 0.0, %v1321
        %1323 = vmatmul.f32.gmra.mxu0 %v1143
        %v1324 = vpop.f32.mrf.mxu0
        %v1325 = vadd.f32 0.0, %v1324
        %1326 = vdwg.mxu0
        %1327 = vmatpush.msra.mxu0 0.0
        %1328 = vmatpush.msra.mxu0 0.0
        %1329 = vmatpush.msra.mxu0 0.0
        %1330 = vmatpush.msra.mxu0 0.0
        %1331 = vmatpush.msra.mxu0 0.0
        %1332 = vmatpush.msra.mxu0 0.0
        %1333 = vmatpush.msra.mxu0 0.0
        %1334 = vmatpush.msra.mxu0 0.0
        %1335 = vmatpush.msra.mxu0 0.0
        %1336 = vmatpush.msra.mxu0 0.0
        %1337 = vmatpush.msra.mxu0 0.0
        %1338 = vmatpush.msra.mxu0 0.0
        %1339 = vmatpush.msra.mxu0 0.0
        %1340 = vmatpush.msra.mxu0 0.0
        %1341 = vmatpush.msra.mxu0 0.0
        %1342 = vmatpush.msra.mxu0 %v1126
        %1343 = vmatmul.f32.gmra.mxu0 %v1137
        %v1344 = vpop.f32.mrf.mxu0
        %v1345 = vadd.f32 0.0, %v1344
        %1346 = vmatmul.f32.gmra.mxu0 %v1140
        %v1347 = vpop.f32.mrf.mxu0
        %v1348 = vadd.f32 0.0, %v1347
        %1349 = vmatmul.f32.gmra.mxu0 %v1143
        %v1350 = vpop.f32.mrf.mxu0
        %v1351 = vadd.f32 0.0, %v1350
        %1352 = vdwg.mxu0
        %1353 = vmatpush.msra.mxu0 0.0
        %1354 = vmatpush.msra.mxu0 0.0
        %1355 = vmatpush.msra.mxu0 0.0
        %1356 = vmatpush.msra.mxu0 0.0
        %1357 = vmatpush.msra.mxu0 0.0
        %1358 = vmatpush.msra.mxu0 0.0
        %1359 = vmatpush.msra.mxu0 0.0
        %1360 = vmatpush.msra.mxu0 0.0
        %1361 = vmatpush.msra.mxu0 0.0
        %1362 = vmatpush.msra.mxu0 0.0
        %1363 = vmatpush.msra.mxu0 0.0
        %1364 = vmatpush.msra.mxu0 0.0
        %1365 = vmatpush.msra.mxu0 0.0
        %1366 = vmatpush.msra.mxu0 0.0
        %1367 = vmatpush.msra.mxu0 0.0
        %1368 = vmatpush.msra.mxu0 %v1127
        %1369 = vmatmul.f32.gmra.mxu0 %v1137
        %v1370 = vpop.f32.mrf.mxu0
        %v1371 = vadd.f32 0.0, %v1370
        %1372 = vmatmul.f32.gmra.mxu0 %v1140
        %v1373 = vpop.f32.mrf.mxu0
        %v1374 = vadd.f32 0.0, %v1373
        %1375 = vmatmul.f32.gmra.mxu0 %v1143
        %v1376 = vpop.f32.mrf.mxu0
        %v1377 = vadd.f32 0.0, %v1376
        %1378 = vdwg.mxu0
        %1379 = vmatpush.msra.mxu0 0.0
        %1380 = vmatpush.msra.mxu0 0.0
        %1381 = vmatpush.msra.mxu0 0.0
        %1382 = vmatpush.msra.mxu0 0.0
        %1383 = vmatpush.msra.mxu0 0.0
        %1384 = vmatpush.msra.mxu0 0.0
        %1385 = vmatpush.msra.mxu0 0.0
        %1386 = vmatpush.msra.mxu0 0.0
        %1387 = vmatpush.msra.mxu0 0.0
        %1388 = vmatpush.msra.mxu0 0.0
        %1389 = vmatpush.msra.mxu0 0.0
        %1390 = vmatpush.msra.mxu0 0.0
        %1391 = vmatpush.msra.mxu0 0.0
        %1392 = vmatpush.msra.mxu0 0.0
        %1393 = vmatpush.msra.mxu0 0.0
        %1394 = vmatpush.msra.mxu0 %v1128
        %1395 = vmatmul.f32.gmra.mxu0 %v1137
        %v1396 = vpop.f32.mrf.mxu0
        %v1397 = vadd.f32 0.0, %v1396
        %1398 = vmatmul.f32.gmra.mxu0 %v1140
        %v1399 = vpop.f32.mrf.mxu0
        %v1400 = vadd.f32 0.0, %v1399
        %1401 = vmatmul.f32.gmra.mxu0 %v1143
        %v1402 = vpop.f32.mrf.mxu0
        %v1403 = vadd.f32 0.0, %v1402
        %1404 = vdwg.mxu0
        %1405 = vmatpush.msra.mxu0 0.0
        %1406 = vmatpush.msra.mxu0 0.0
        %1407 = vmatpush.msra.mxu0 0.0
        %1408 = vmatpush.msra.mxu0 0.0
        %1409 = vmatpush.msra.mxu0 0.0
        %1410 = vmatpush.msra.mxu0 0.0
        %1411 = vmatpush.msra.mxu0 0.0
        %1412 = vmatpush.msra.mxu0 0.0
        %1413 = vmatpush.msra.mxu0 0.0
        %1414 = vmatpush.msra.mxu0 0.0
        %1415 = vmatpush.msra.mxu0 0.0
        %1416 = vmatpush.msra.mxu0 0.0
        %1417 = vmatpush.msra.mxu0 0.0
        %1418 = vmatpush.msra.mxu0 0.0
        %1419 = vmatpush.msra.mxu0 0.0
        %1420 = vmatpush.msra.mxu0 %v1129
        %1421 = vmatmul.f32.gmra.mxu0 %v1137
        %v1422 = vpop.f32.mrf.mxu0
        %v1423 = vadd.f32 0.0, %v1422
        %1424 = vmatmul.f32.gmra.mxu0 %v1140
        %v1425 = vpop.f32.mrf.mxu0
        %v1426 = vadd.f32 0.0, %v1425
        %1427 = vmatmul.f32.gmra.mxu0 %v1143
        %v1428 = vpop.f32.mrf.mxu0
        %v1429 = vadd.f32 0.0, %v1428
        %1430 = vdwg.mxu0
        %1431 = vmatpush.msra.mxu0 0.0
        %1432 = vmatpush.msra.mxu0 0.0
        %1433 = vmatpush.msra.mxu0 0.0
        %1434 = vmatpush.msra.mxu0 0.0
        %1435 = vmatpush.msra.mxu0 0.0
        %1436 = vmatpush.msra.mxu0 0.0
        %1437 = vmatpush.msra.mxu0 0.0
        %1438 = vmatpush.msra.mxu0 0.0
        %1439 = vmatpush.msra.mxu0 0.0
        %1440 = vmatpush.msra.mxu0 0.0
        %1441 = vmatpush.msra.mxu0 0.0
        %1442 = vmatpush.msra.mxu0 0.0
        %1443 = vmatpush.msra.mxu0 0.0
        %1444 = vmatpush.msra.mxu0 0.0
        %1445 = vmatpush.msra.mxu0 0.0
        %1446 = vmatpush.msra.mxu0 %v1130
        %1447 = vmatmul.f32.gmra.mxu0 %v1137
        %v1448 = vpop.f32.mrf.mxu0
        %v1449 = vadd.f32 0.0, %v1448
        %1450 = vmatmul.f32.gmra.mxu0 %v1140
        %v1451 = vpop.f32.mrf.mxu0
        %v1452 = vadd.f32 0.0, %v1451
        %1453 = vmatmul.f32.gmra.mxu0 %v1143
        %v1454 = vpop.f32.mrf.mxu0
        %v1455 = vadd.f32 0.0, %v1454
        %1456 = vdwg.mxu0
        %1457 = vmatpush.msra.mxu0 0.0
        %1458 = vmatpush.msra.mxu0 0.0
        %1459 = vmatpush.msra.mxu0 0.0
        %1460 = vmatpush.msra.mxu0 0.0
        %1461 = vmatpush.msra.mxu0 0.0
        %1462 = vmatpush.msra.mxu0 0.0
        %1463 = vmatpush.msra.mxu0 0.0
        %1464 = vmatpush.msra.mxu0 0.0
        %1465 = vmatpush.msra.mxu0 0.0
        %1466 = vmatpush.msra.mxu0 0.0
        %1467 = vmatpush.msra.mxu0 0.0
        %1468 = vmatpush.msra.mxu0 0.0
        %1469 = vmatpush.msra.mxu0 0.0
        %1470 = vmatpush.msra.mxu0 0.0
        %1471 = vmatpush.msra.mxu0 0.0
        %1472 = vmatpush.msra.mxu0 %v1131
        %1473 = vmatmul.f32.gmra.mxu0 %v1137
        %v1474 = vpop.f32.mrf.mxu0
        %v1475 = vadd.f32 0.0, %v1474
        %1476 = vmatmul.f32.gmra.mxu0 %v1140
        %v1477 = vpop.f32.mrf.mxu0
        %v1478 = vadd.f32 0.0, %v1477
        %1479 = vmatmul.f32.gmra.mxu0 %v1143
        %v1480 = vpop.f32.mrf.mxu0
        %v1481 = vadd.f32 0.0, %v1480
        %1482 = vdwg.mxu0
        %1483 = vmatpush.msra.mxu0 0.0
        %1484 = vmatpush.msra.mxu0 0.0
        %1485 = vmatpush.msra.mxu0 0.0
        %1486 = vmatpush.msra.mxu0 0.0
        %1487 = vmatpush.msra.mxu0 0.0
        %1488 = vmatpush.msra.mxu0 0.0
        %1489 = vmatpush.msra.mxu0 0.0
        %1490 = vmatpush.msra.mxu0 0.0
        %1491 = vmatpush.msra.mxu0 0.0
        %1492 = vmatpush.msra.mxu0 0.0
        %1493 = vmatpush.msra.mxu0 0.0
        %1494 = vmatpush.msra.mxu0 0.0
        %1495 = vmatpush.msra.mxu0 0.0
        %1496 = vmatpush.msra.mxu0 0.0
        %1497 = vmatpush.msra.mxu0 0.0
        %1498 = vmatpush.msra.mxu0 %v1132
        %1499 = vmatmul.f32.gmra.mxu0 %v1137
        %v1500 = vpop.f32.mrf.mxu0
        %v1501 = vadd.f32 0.0, %v1500
        %1502 = vmatmul.f32.gmra.mxu0 %v1140
        %v1503 = vpop.f32.mrf.mxu0
        %v1504 = vadd.f32 0.0, %v1503
        %1505 = vmatmul.f32.gmra.mxu0 %v1143
        %v1506 = vpop.f32.mrf.mxu0
        %v1507 = vadd.f32 0.0, %v1506
        %1508 = vdwg.mxu0
        %1509 = vmatpush.msra.mxu0 0.0
        %1510 = vmatpush.msra.mxu0 0.0
        %1511 = vmatpush.msra.mxu0 0.0
        %1512 = vmatpush.msra.mxu0 0.0
        %1513 = vmatpush.msra.mxu0 0.0
        %1514 = vmatpush.msra.mxu0 0.0
        %1515 = vmatpush.msra.mxu0 0.0
        %1516 = vmatpush.msra.mxu0 0.0
        %1517 = vmatpush.msra.mxu0 0.0
        %1518 = vmatpush.msra.mxu0 0.0
        %1519 = vmatpush.msra.mxu0 0.0
        %1520 = vmatpush.msra.mxu0 0.0
        %1521 = vmatpush.msra.mxu0 0.0
        %1522 = vmatpush.msra.mxu0 0.0
        %1523 = vmatpush.msra.mxu0 0.0
        %1524 = vmatpush.msra.mxu0 %v1133
        %1525 = vmatmul.f32.gmra.mxu0 %v1137
        %v1526 = vpop.f32.mrf.mxu0
        %v1527 = vadd.f32 0.0, %v1526
        %1528 = vmatmul.f32.gmra.mxu0 %v1140
        %v1529 = vpop.f32.mrf.mxu0
        %v1530 = vadd.f32 0.0, %v1529
        %1531 = vmatmul.f32.gmra.mxu0 %v1143
        %v1532 = vpop.f32.mrf.mxu0
        %v1533 = vadd.f32 0.0, %v1532
        %1534 = vdwg.mxu0
        %1535 = vmatpush.msra.mxu0 0.0
        %1536 = vmatpush.msra.mxu0 0.0
        %1537 = vmatpush.msra.mxu0 0.0
        %1538 = vmatpush.msra.mxu0 0.0
        %1539 = vmatpush.msra.mxu0 0.0
        %1540 = vmatpush.msra.mxu0 0.0
        %1541 = vmatpush.msra.mxu0 0.0
        %1542 = vmatpush.msra.mxu0 0.0
        %1543 = vmatpush.msra.mxu0 0.0
        %1544 = vmatpush.msra.mxu0 0.0
        %1545 = vmatpush.msra.mxu0 0.0
        %1546 = vmatpush.msra.mxu0 0.0
        %1547 = vmatpush.msra.mxu0 0.0
        %1548 = vmatpush.msra.mxu0 0.0
        %1549 = vmatpush.msra.mxu0 0.0
        %1550 = vmatpush.msra.mxu0 %v1134
        %1551 = vmatmul.f32.gmra.mxu0 %v1137
        %v1552 = vpop.f32.mrf.mxu0
        %v1553 = vadd.f32 0.0, %v1552
        %1554 = vmatmul.f32.gmra.mxu0 %v1140
        %v1555 = vpop.f32.mrf.mxu0
        %v1556 = vadd.f32 0.0, %v1555
        %1557 = vmatmul.f32.gmra.mxu0 %v1143
        %v1558 = vpop.f32.mrf.mxu0
        %v1559 = vadd.f32 0.0, %v1558
        %1560 = vdwg.mxu0
        %p1561 = scmp.eq.s32.totalorder %s26, 0
        // Predicated region
        $region41: #{tpu_custom_call.1} parent=39 // pred_check
          %p1562 = pneg %p1561
        $region42: #{tpu_custom_call.1} parent=39 // pred_check_branch
          %1564 = sbr.rel (%p1562) target = $region44
        $region43: #{tpu_custom_call.1} parent=39 // pred_region
          %vm1565 = vcmask 195584
          %1566 = vst.msk [vmem:[#allocation2] sm:$0xff] %vm1565, -3.4028235e+38
        $region44: #{tpu_custom_call.1} parent=39 // pred_fallthru
          _
        %p1567 = scmp.lt.s32.totalorder %s26, 0
        // Predicated region
        $region45: #{tpu_custom_call.1} parent=39 // pred_check
          %p1568 = pneg %p1567
        $region46: #{tpu_custom_call.1} parent=39 // pred_check_branch
          %1570 = sbr.rel (%p1568) target = $region48
        $region47: #{tpu_custom_call.1} parent=39 // pred_region
          %v1571 = vld [vmem:[#allocation2] sm:$0xff]
          %v1572 = vmax.f32 %v1163, %v1189
          %1573 = vmax.xlane.f32.xlu0 %v1572
          %v1574 = vpop.xlane.xlu0 %1573
          %v1575 = vmax.f32 %v1166, %v1192
          %1576 = vmax.xlane.f32.xlu0 %v1575
          %v1577 = vpop.xlane.xlu0 %1576
          %v1578 = vmax.f32 %v1169, %v1195
          %1579 = vmax.xlane.f32.xlu0 %v1578
          %v1580 = vpop.xlane.xlu0 %1579
          %v1581 = vmax.f32 %v1215, %v1241
          %1582 = vmax.xlane.f32.xlu0 %v1581
          %v1583 = vpop.xlane.xlu0 %1582
          %v1584 = vmax.f32 %v1218, %v1244
          %1585 = vmax.xlane.f32.xlu0 %v1584
          %v1586 = vpop.xlane.xlu0 %1585
          %v1587 = vmax.f32 %v1221, %v1247
          %1588 = vmax.xlane.f32.xlu0 %v1587
          %v1589 = vpop.xlane.xlu0 %1588
          %v1590 = vmax.f32 %v1267, %v1293
          %1591 = vmax.xlane.f32.xlu0 %v1590
          %v1592 = vpop.xlane.xlu0 %1591
          %v1593 = vmax.f32 %v1270, %v1296
          %1594 = vmax.xlane.f32.xlu0 %v1593
          %v1595 = vpop.xlane.xlu0 %1594
          %v1596 = vmax.f32 %v1273, %v1299
          %1597 = vmax.xlane.f32.xlu0 %v1596
          %v1598 = vpop.xlane.xlu0 %1597
          %v1599 = vmax.f32 %v1319, %v1345
          %1600 = vmax.xlane.f32.xlu0 %v1599
          %v1601 = vpop.xlane.xlu0 %1600
          %v1602 = vmax.f32 %v1322, %v1348
          %1603 = vmax.xlane.f32.xlu0 %v1602
          %v1604 = vpop.xlane.xlu0 %1603
          %v1605 = vmax.f32 %v1325, %v1351
          %1606 = vmax.xlane.f32.xlu0 %v1605
          %v1607 = vpop.xlane.xlu0 %1606
          %v1608 = vmax.f32 %v1371, %v1397
          %1609 = vmax.xlane.f32.xlu0 %v1608
          %v1610 = vpop.xlane.xlu0 %1609
          %v1611 = vmax.f32 %v1374, %v1400
          %1612 = vmax.xlane.f32.xlu0 %v1611
          %v1613 = vpop.xlane.xlu0 %1612
          %v1614 = vmax.f32 %v1377, %v1403
          %1615 = vmax.xlane.f32.xlu0 %v1614
          %v1616 = vpop.xlane.xlu0 %1615
          %v1617 = vmax.f32 %v1423, %v1449
          %1618 = vmax.xlane.f32.xlu0 %v1617
          %v1619 = vpop.xlane.xlu0 %1618
          %v1620 = vmax.f32 %v1426, %v1452
          %1621 = vmax.xlane.f32.xlu0 %v1620
          %v1622 = vpop.xlane.xlu0 %1621
          %v1623 = vmax.f32 %v1429, %v1455
          %1624 = vmax.xlane.f32.xlu0 %v1623
          %v1625 = vpop.xlane.xlu0 %1624
          %v1626 = vmax.f32 %v1475, %v1501
          %1627 = vmax.xlane.f32.xlu0 %v1626
          %v1628 = vpop.xlane.xlu0 %1627
          %v1629 = vmax.f32 %v1478, %v1504
          %1630 = vmax.xlane.f32.xlu0 %v1629
          %v1631 = vpop.xlane.xlu0 %1630
          %v1632 = vmax.f32 %v1481, %v1507
          %1633 = vmax.xlane.f32.xlu0 %v1632
          %v1634 = vpop.xlane.xlu0 %1633
          %v1635 = vmax.f32 %v1527, %v1553
          %1636 = vmax.xlane.f32.xlu0 %v1635
          %v1637 = vpop.xlane.xlu0 %1636
          %v1638 = vmax.f32 %v1530, %v1556
          %1639 = vmax.xlane.f32.xlu0 %v1638
          %v1640 = vpop.xlane.xlu0 %1639
          %v1641 = vmax.f32 %v1533, %v1559
          %1642 = vmax.xlane.f32.xlu0 %v1641
          %v1643 = vpop.xlane.xlu0 %1642
          %v1668 = vlaneseq
          %v1669 = vand.u32 %v1668, 127
          %v1670 = vperm.slane %v1574, %v1669
          %v1671 = vadd.s32 %v1669, 4294967288
          %v1672 = vperm.slane %v1577, %v1671
          %vm1673 = vcmask 130112
          %v1674 = vsel %vm1673, %v1672, %v1670
          %v1675 = vadd.s32 %v1669, 4294967280
          %v1676 = vperm.slane %v1580, %v1675
          %vm1677 = vcmask 195712
          %v1678 = vsel %vm1677, %v1676, %v1674
          %v1679 = vperm.slane %v1583, %v1669
          %v1680 = vperm.slane %v1586, %v1671
          %v1681 = vsel %vm1673, %v1680, %v1679
          %v1682 = vperm.slane %v1589, %v1675
          %v1683 = vsel %vm1677, %v1682, %v1681
          %v1684 = vperm.slane %v1592, %v1669
          %v1685 = vperm.slane %v1595, %v1671
          %v1686 = vsel %vm1673, %v1685, %v1684
          %v1687 = vperm.slane %v1598, %v1675
          %v1688 = vsel %vm1677, %v1687, %v1686
          %v1689 = vperm.slane %v1601, %v1669
          %v1690 = vperm.slane %v1604, %v1671
          %v1691 = vsel %vm1673, %v1690, %v1689
          %v1692 = vperm.slane %v1607, %v1675
          %v1693 = vsel %vm1677, %v1692, %v1691
          %v1694 = vperm.slane %v1610, %v1669
          %v1695 = vperm.slane %v1613, %v1671
          %v1696 = vsel %vm1673, %v1695, %v1694
          %v1697 = vperm.slane %v1616, %v1675
          %v1698 = vsel %vm1677, %v1697, %v1696
          %v1699 = vperm.slane %v1619, %v1669
          %v1700 = vperm.slane %v1622, %v1671
          %v1701 = vsel %vm1673, %v1700, %v1699
          %v1702 = vperm.slane %v1625, %v1675
          %v1703 = vsel %vm1677, %v1702, %v1701
          %v1704 = vperm.slane %v1628, %v1669
          %v1705 = vperm.slane %v1631, %v1671
          %v1706 = vsel %vm1673, %v1705, %v1704
          %v1707 = vperm.slane %v1634, %v1675
          %v1708 = vsel %vm1677, %v1707, %v1706
          %v1709 = vperm.slane %v1637, %v1669
          %v1710 = vperm.slane %v1640, %v1671
          %v1711 = vsel %vm1673, %v1710, %v1709
          %v1712 = vperm.slane %v1643, %v1675
          %v1713 = vsel %vm1677, %v1712, %v1711
          %v1714 = vsel %vm351, %v1683, %v1678
          %v1715 = vsel %vm354, %v1688, %v1714
          %v1716 = vsel %vm357, %v1693, %v1715
          %v1717 = vsel %vm360, %v1698, %v1716
          %v1718 = vsel %vm363, %v1703, %v1717
          %v1719 = vsel %vm366, %v1708, %v1718
          %vm1720 = vcmask 1047559
          %v1721 = vsel %vm1720, %v1713, %v1719
          %v1723 = vmax.f32 %v1571, %v1721
          %vm1724 = vcmask 195584
          %1725 = vst.msk [vmem:[#allocation2] sm:$0xff] %vm1724, %v1723
        $region48: #{tpu_custom_call.1} parent=39 // pred_fallthru
          _
        %p1726 = scmp.ge.s32.totalorder %s26, 0
        // Predicated region
        $region49: #{tpu_custom_call.1} parent=39 // pred_check
          %p1727 = pneg %p1726
        $region50: #{tpu_custom_call.1} parent=39 // pred_check_branch
          %1729 = sbr.rel (%p1727) target = $region52
        $region51: #{tpu_custom_call.1} parent=39 // pred_region
          %s1730 = smul.u32 %s26, 256
          %v1731 = vlaneseq
          %v1732 = vand.u32 %v1731, 127
          %v1733 = vadd.s32 %v1732, 128
          %v1734 = vstv %s1730
          %v1735 = vadd.s32 %v1734, %v1732
          %v1736 = vadd.s32 %v1734, %v1733
          %v1737 = vld [vmem:[%s332] sm:$0xff]
          %v1738 = vld [vmem:[%s332 + $0x8] sm:$0xff]
          %v1739 = vld [vmem:[%s332 + $0x10] sm:$0xff]
          %1740 = vset.pattern.permute.xlu0 0
          %1741 = vperm.xlu0 %1740, %v1737
          %v1742 = vpop.permute.xlu0 %1741
          %1743 = vset.pattern.permute.xlu0 0
          %1744 = vperm.xlu0 %1743, %v1738
          %v1745 = vpop.permute.xlu0 %1744
          %1746 = vset.pattern.permute.xlu0 0
          %1747 = vperm.xlu0 %1746, %v1739
          %v1748 = vpop.permute.xlu0 %1747
          %vm1749 = vcmp.le.s32.totalorder %v1735, %v1742
          %vm1750 = vcmp.le.s32.totalorder %v1736, %v1742
          %vm1751 = vcmp.le.s32.totalorder %v1735, %v1745
          %vm1752 = vcmp.le.s32.totalorder %v1736, %v1745
          %vm1753 = vcmp.le.s32.totalorder %v1735, %v1748
          %vm1754 = vcmp.le.s32.totalorder %v1736, %v1748
          %v1755 = vsel %vm1749, 1, 0
          %v1756 = vsel %vm1750, 1, 0
          %v1757 = vsel %vm1751, 1, 0
          %v1758 = vsel %vm1752, 1, 0
          %v1759 = vsel %vm1753, 1, 0
          %v1760 = vsel %vm1754, 1, 0
          %vm1761 = vcmp.eq.s32.totalorder %v1755, 1
          %vm1762 = vcmp.eq.s32.totalorder %v1756, 1
          %vm1763 = vcmp.eq.s32.totalorder %v1757, 1
          %vm1764 = vcmp.eq.s32.totalorder %v1758, 1
          %vm1765 = vcmp.eq.s32.totalorder %v1759, 1
          %vm1766 = vcmp.eq.s32.totalorder %v1760, 1
          %v1767 = vsel %vm1761, %v1163, -3.4028235e+38
          %v1768 = vsel %vm1762, %v1189, -3.4028235e+38
          %v1769 = vsel %vm1763, %v1166, -3.4028235e+38
          %v1770 = vsel %vm1764, %v1192, -3.4028235e+38
          %v1771 = vsel %vm1765, %v1169, -3.4028235e+38
          %v1772 = vsel %vm1766, %v1195, -3.4028235e+38
          %v1773 = vsel %vm1761, %v1215, -3.4028235e+38
          %v1774 = vsel %vm1762, %v1241, -3.4028235e+38
          %v1775 = vsel %vm1763, %v1218, -3.4028235e+38
          %v1776 = vsel %vm1764, %v1244, -3.4028235e+38
          %v1777 = vsel %vm1765, %v1221, -3.4028235e+38
          %v1778 = vsel %vm1766, %v1247, -3.4028235e+38
          %v1779 = vsel %vm1761, %v1267, -3.4028235e+38
          %v1780 = vsel %vm1762, %v1293, -3.4028235e+38
          %v1781 = vsel %vm1763, %v1270, -3.4028235e+38
          %v1782 = vsel %vm1764, %v1296, -3.4028235e+38
          %v1783 = vsel %vm1765, %v1273, -3.4028235e+38
          %v1784 = vsel %vm1766, %v1299, -3.4028235e+38
          %v1785 = vsel %vm1761, %v1319, -3.4028235e+38
          %v1786 = vsel %vm1762, %v1345, -3.4028235e+38
          %v1787 = vsel %vm1763, %v1322, -3.4028235e+38
          %v1788 = vsel %vm1764, %v1348, -3.4028235e+38
          %v1789 = vsel %vm1765, %v1325, -3.4028235e+38
          %v1790 = vsel %vm1766, %v1351, -3.4028235e+38
          %v1791 = vsel %vm1761, %v1371, -3.4028235e+38
          %v1792 = vsel %vm1762, %v1397, -3.4028235e+38
          %v1793 = vsel %vm1763, %v1374, -3.4028235e+38
          %v1794 = vsel %vm1764, %v1400, -3.4028235e+38
          %v1795 = vsel %vm1765, %v1377, -3.4028235e+38
          %v1796 = vsel %vm1766, %v1403, -3.4028235e+38
          %v1797 = vsel %vm1761, %v1423, -3.4028235e+38
          %v1798 = vsel %vm1762, %v1449, -3.4028235e+38
          %v1799 = vsel %vm1763, %v1426, -3.4028235e+38
          %v1800 = vsel %vm1764, %v1452, -3.4028235e+38
          %v1801 = vsel %vm1765, %v1429, -3.4028235e+38
          %v1802 = vsel %vm1766, %v1455, -3.4028235e+38
          %v1803 = vsel %vm1761, %v1475, -3.4028235e+38
          %v1804 = vsel %vm1762, %v1501, -3.4028235e+38
          %v1805 = vsel %vm1763, %v1478, -3.4028235e+38
          %v1806 = vsel %vm1764, %v1504, -3.4028235e+38
          %v1807 = vsel %vm1765, %v1481, -3.4028235e+38
          %v1808 = vsel %vm1766, %v1507, -3.4028235e+38
          %v1809 = vsel %vm1761, %v1527, -3.4028235e+38
          %v1810 = vsel %vm1762, %v1553, -3.4028235e+38
          %v1811 = vsel %vm1763, %v1530, -3.4028235e+38
          %v1812 = vsel %vm1764, %v1556, -3.4028235e+38
          %v1813 = vsel %vm1765, %v1533, -3.4028235e+38
          %v1814 = vsel %vm1766, %v1559, -3.4028235e+38
          %v1815 = vmax.f32 %v1767, %v1768
          %1816 = vmax.xlane.f32.xlu0 %v1815
          %v1817 = vpop.xlane.xlu0 %1816
          %v1818 = vmax.f32 %v1769, %v1770
          %1819 = vmax.xlane.f32.xlu0 %v1818
          %v1820 = vpop.xlane.xlu0 %1819
          %v1821 = vmax.f32 %v1771, %v1772
          %1822 = vmax.xlane.f32.xlu0 %v1821
          %v1823 = vpop.xlane.xlu0 %1822
          %v1824 = vmax.f32 %v1773, %v1774
          %1825 = vmax.xlane.f32.xlu0 %v1824
          %v1826 = vpop.xlane.xlu0 %1825
          %v1827 = vmax.f32 %v1775, %v1776
          %1828 = vmax.xlane.f32.xlu0 %v1827
          %v1829 = vpop.xlane.xlu0 %1828
          %v1830 = vmax.f32 %v1777, %v1778
          %1831 = vmax.xlane.f32.xlu0 %v1830
          %v1832 = vpop.xlane.xlu0 %1831
          %v1833 = vmax.f32 %v1779, %v1780
          %1834 = vmax.xlane.f32.xlu0 %v1833
          %v1835 = vpop.xlane.xlu0 %1834
          %v1836 = vmax.f32 %v1781, %v1782
          %1837 = vmax.xlane.f32.xlu0 %v1836
          %v1838 = vpop.xlane.xlu0 %1837
          %v1839 = vmax.f32 %v1783, %v1784
          %1840 = vmax.xlane.f32.xlu0 %v1839
          %v1841 = vpop.xlane.xlu0 %1840
          %v1842 = vmax.f32 %v1785, %v1786
          %1843 = vmax.xlane.f32.xlu0 %v1842
          %v1844 = vpop.xlane.xlu0 %1843
          %v1845 = vmax.f32 %v1787, %v1788
          %1846 = vmax.xlane.f32.xlu0 %v1845
          %v1847 = vpop.xlane.xlu0 %1846
          %v1848 = vmax.f32 %v1789, %v1790
          %1849 = vmax.xlane.f32.xlu0 %v1848
          %v1850 = vpop.xlane.xlu0 %1849
          %v1851 = vmax.f32 %v1791, %v1792
          %1852 = vmax.xlane.f32.xlu0 %v1851
          %v1853 = vpop.xlane.xlu0 %1852
          %v1854 = vmax.f32 %v1793, %v1794
          %1855 = vmax.xlane.f32.xlu0 %v1854
          %v1856 = vpop.xlane.xlu0 %1855
          %v1857 = vmax.f32 %v1795, %v1796
          %1858 = vmax.xlane.f32.xlu0 %v1857
          %v1859 = vpop.xlane.xlu0 %1858
          %v1860 = vmax.f32 %v1797, %v1798
          %1861 = vmax.xlane.f32.xlu0 %v1860
          %v1862 = vpop.xlane.xlu0 %1861
          %v1863 = vmax.f32 %v1799, %v1800
          %1864 = vmax.xlane.f32.xlu0 %v1863
          %v1865 = vpop.xlane.xlu0 %1864
          %v1866 = vmax.f32 %v1801, %v1802
          %1867 = vmax.xlane.f32.xlu0 %v1866
          %v1868 = vpop.xlane.xlu0 %1867
          %v1869 = vmax.f32 %v1803, %v1804
          %1870 = vmax.xlane.f32.xlu0 %v1869
          %v1871 = vpop.xlane.xlu0 %1870
          %v1872 = vmax.f32 %v1805, %v1806
          %1873 = vmax.xlane.f32.xlu0 %v1872
          %v1874 = vpop.xlane.xlu0 %1873
          %v1875 = vmax.f32 %v1807, %v1808
          %1876 = vmax.xlane.f32.xlu0 %v1875
          %v1877 = vpop.xlane.xlu0 %1876
          %v1878 = vmax.f32 %v1809, %v1810
          %1879 = vmax.xlane.f32.xlu0 %v1878
          %v1880 = vpop.xlane.xlu0 %1879
          %v1881 = vmax.f32 %v1811, %v1812
          %1882 = vmax.xlane.f32.xlu0 %v1881
          %v1883 = vpop.xlane.xlu0 %1882
          %v1884 = vmax.f32 %v1813, %v1814
          %1885 = vmax.xlane.f32.xlu0 %v1884
          %v1886 = vpop.xlane.xlu0 %1885
          %v1887 = vld [vmem:[#allocation2] sm:$0xff]
          %v1912 = vperm.slane %v1817, %v1732
          %v1913 = vadd.s32 %v1732, 4294967288
          %v1914 = vperm.slane %v1820, %v1913
          %vm1915 = vcmask 130112
          %v1916 = vsel %vm1915, %v1914, %v1912
          %v1917 = vadd.s32 %v1732, 4294967280
          %v1918 = vperm.slane %v1823, %v1917
          %vm1919 = vcmask 195712
          %v1920 = vsel %vm1919, %v1918, %v1916
          %v1921 = vperm.slane %v1826, %v1732
          %v1922 = vperm.slane %v1829, %v1913
          %v1923 = vsel %vm1915, %v1922, %v1921
          %v1924 = vperm.slane %v1832, %v1917
          %v1925 = vsel %vm1919, %v1924, %v1923
          %v1926 = vperm.slane %v1835, %v1732
          %v1927 = vperm.slane %v1838, %v1913
          %v1928 = vsel %vm1915, %v1927, %v1926
          %v1929 = vperm.slane %v1841, %v1917
          %v1930 = vsel %vm1919, %v1929, %v1928
          %v1931 = vperm.slane %v1844, %v1732
          %v1932 = vperm.slane %v1847, %v1913
          %v1933 = vsel %vm1915, %v1932, %v1931
          %v1934 = vperm.slane %v1850, %v1917
          %v1935 = vsel %vm1919, %v1934, %v1933
          %v1936 = vperm.slane %v1853, %v1732
          %v1937 = vperm.slane %v1856, %v1913
          %v1938 = vsel %vm1915, %v1937, %v1936
          %v1939 = vperm.slane %v1859, %v1917
          %v1940 = vsel %vm1919, %v1939, %v1938
          %v1941 = vperm.slane %v1862, %v1732
          %v1942 = vperm.slane %v1865, %v1913
          %v1943 = vsel %vm1915, %v1942, %v1941
          %v1944 = vperm.slane %v1868, %v1917
          %v1945 = vsel %vm1919, %v1944, %v1943
          %v1946 = vperm.slane %v1871, %v1732
          %v1947 = vperm.slane %v1874, %v1913
          %v1948 = vsel %vm1915, %v1947, %v1946
          %v1949 = vperm.slane %v1877, %v1917
          %v1950 = vsel %vm1919, %v1949, %v1948
          %v1951 = vperm.slane %v1880, %v1732
          %v1952 = vperm.slane %v1883, %v1913
          %v1953 = vsel %vm1915, %v1952, %v1951
          %v1954 = vperm.slane %v1886, %v1917
          %v1955 = vsel %vm1919, %v1954, %v1953
          %v1956 = vsel %vm351, %v1925, %v1920
          %v1957 = vsel %vm354, %v1930, %v1956
          %v1958 = vsel %vm357, %v1935, %v1957
          %v1959 = vsel %vm360, %v1940, %v1958
          %v1960 = vsel %vm363, %v1945, %v1959
          %v1961 = vsel %vm366, %v1950, %v1960
          %vm1962 = vcmask 1047559
          %v1963 = vsel %vm1962, %v1955, %v1961
          %v1965 = vmax.f32 %v1887, %v1963
          %vm1966 = vcmask 195584
          %1967 = vst.msk [vmem:[#allocation2] sm:$0xff] %vm1966, %v1965
        $region52: #{tpu_custom_call.1} parent=39 // pred_fallthru
          _
        // Predicated region
        $region53: #{tpu_custom_call.1} parent=39 // pred_check
          %p1968 = pneg %p1561
        $region54: #{tpu_custom_call.1} parent=39 // pred_check_branch
          %1970 = sbr.rel (%p1968) target = $region56
        $region55: #{tpu_custom_call.1} parent=39 // pred_region
          %v1971 = vld [vmem:[#allocation2] sm:$0xff]
          %v1972 = vld [vmem:[%s327] sm:$0x1]
          %v1974 = vperm.slane %v1972, 0
          %v1976 = vadd.f32 %v1971, %v1974
          %v1977 = vmax.f32 %v1976, 0.0
          %v1978 = vld [vmem:[%s338] sm:$0xff]
          %v1979 = vld [vmem:[%s338 + $0x8] sm:$0xff]
          %v1980 = vld [vmem:[%s338 + $0x10] sm:$0xff]
          %vm1981 = vcmask 195584
          %v1983 = vsel %vm1981, %v1977, 0
          %1985 = vmatpush.msra.mxu0 0.0
          %1986 = vmatpush.msra.mxu0 0.0
          %1987 = vmatpush.msra.mxu0 0.0
          %1988 = vmatpush.msra.mxu0 0.0
          %1989 = vmatpush.msra.mxu0 0.0
          %1990 = vmatpush.msra.mxu0 0.0
          %1991 = vmatpush.msra.mxu0 0.0
          %1992 = vmatpush.msra.mxu0 0.0
          %1993 = vmatpush.msra.mxu0 0.0
          %1994 = vmatpush.msra.mxu0 0.0
          %1995 = vmatpush.msra.mxu0 0.0
          %1996 = vmatpush.msra.mxu0 0.0
          %1997 = vmatpush.msra.mxu0 0.0
          %1998 = vmatpush.msra.mxu0 %v1980
          %1999 = vmatpush.msra.mxu0 %v1979
          %2000 = vmatpush.msra.mxu0 %v1978
          %2001 = vmatmul.f32.gmra.mxu0 %v1983
          %v2002 = vpop.f32.mrf.mxu0
          %v2003 = vadd.f32 0.0, %v2002
          %2004 = vdwg.mxu0
          %vm2005 = vcmask 130048
          %2006 = vst.msk [vmem:[%s308] sm:$0xff] %vm2005, %v2003
        $region56: #{tpu_custom_call.1} parent=39 // pred_fallthru
          _
        %s2007 = sand.u32 %s180, 1
        %s2008 = scalar_lea.sflag [#allocation4], %s2007
        %s2009 = sand.u32 %s180, 1
        %s2010 = smul.addr %s2009, 8
        %s2011 = scalar_lea.vmem [#allocation3], %s2010
        // Predicated region
        $region57: #{tpu_custom_call.1} parent=39 // pred_check
          %p2012 = pneg %p190
        $region58: #{tpu_custom_call.1} parent=39 // pred_check_branch
          %2014 = sbr.rel (%p2012) target = $region60
        $region59: #{tpu_custom_call.1} parent=39 // pred_region
          %2016 = vsyncadd %s2008, 0
          %s2017 = sadd.s32 %s24, %s25
          %s2018 = smul.addr %s2017, 8
          %s2019 = scalar_lea.hbm %s5, %s2018
          %s2021 = sshll.u32 %s2011, 4
          %s2022 = int_to_ptr.vmem [resolvable:$true] %s2021
          %s2023 = sshll.u32 %s2019, 4
          %s2024 = int_to_ptr.hbm [resolvable:$true] %s2023
          %2026 = dma.vmem_to_hbm [thread:$0]  %s2022, 128, %s2024, %s2008
        $region60: #{tpu_custom_call.1} parent=39 // pred_fallthru
          _
      $region40: #{tpu_custom_call.1} parent=5 // pred_fallthru
        _
      %p2027 = scmp.le.s32.totalorder 2, %s14
      // Predicated region
      $region61: #{tpu_custom_call.1} parent=5 // pred_check
        %p2028 = pneg %p2027
      $region62: #{tpu_custom_call.1} parent=5 // pred_check_branch
        %2030 = sbr.rel (%p2028) target = $region64
      $region63: #{tpu_custom_call.1} parent=5 // pred_region
        %s2031 = ssub.s32 %s14, 2
        // Predicated region
        $region65: #{tpu_custom_call.1} parent=63 // pred_check
          %p2032 = pneg %p196
        $region66: #{tpu_custom_call.1} parent=63 // pred_check_branch
          %2034 = sbr.rel (%p2032) target = $region68
        $region67: #{tpu_custom_call.1} parent=63 // pred_region
          %s2035 = sand.u32 %s181, 1
          %s2036 = scalar_lea.sflag [#allocation4], %s2035
          %s2037 = sand.u32 %s181, 1
          %s2038 = smul.addr %s2037, 8
          %s2039 = scalar_lea.vmem [#allocation3], %s2038
          %2041 = dma.done %s2036, 128
        $region68: #{tpu_custom_call.1} parent=63 // pred_fallthru
          _
      $region64: #{tpu_custom_call.1} parent=5 // pred_fallthru
        _
    $region6: #{tpu_custom_call.1} parent=1 // loop_footer
      %s18 = sadd.s32 1, %s14
    $region7: #{tpu_custom_call.1} parent=1 // loop_footer_branch
      %13 = sbr.rel target = $region3
    $region8: #{tpu_custom_call.1} parent=1 // loop_exit
      _
    %2042 = vsyncpa [#allocation4], 1
    %s2043 = scalar_lea.sflag [#allocation4], 1
    %2044 = vsyncpa %s2043, 1

</llo_original>
